<compile_context>
chip_gen: v5e
topology: v5e:2x2
jax: 0.10.0
libtpu: 0.0.40
codegen_flags: <defaults>
</compile_context>

<pallas_src>
import functools

import jax
import jax.numpy as jnp
from jax.experimental import pallas as pl
from jax.experimental.pallas import tpu as pltpu


# ---------------------------------------------------------------------------
# Kernel 1: deg^-1/2 of (A + I), tiled row-sum reduction.
#   grid = (N/bn rows, N/bn cols);  col axis is the reduction (last, "arbitrary")
# ---------------------------------------------------------------------------
def _deg_rsqrt_kernel(a_ref, d_ref, acc_ref):
    k = pl.program_id(1)

    @pl.when(k == 0)
    def _():
        acc_ref[...] = jnp.zeros_like(acc_ref)

    acc_ref[...] += jnp.sum(a_ref[...], axis=1, keepdims=True)

    @pl.when(k == pl.num_programs(1) - 1)
    def _():
        # clamp only affects zero-degree padding rows; real nodes have a
        # self-loop so deg >= 1 and the clamp is a no-op (semantics preserved).
        d_ref[...] = jax.lax.rsqrt(jnp.maximum(acc_ref[...], 1.0))


def _deg_rsqrt(a_pad, bn):
    n_pad = a_pad.shape[0]
    grid = (n_pad // bn, n_pad // bn)
    return pl.pallas_call(
        _deg_rsqrt_kernel,
        out_shape=jax.ShapeDtypeStruct((n_pad, 1), jnp.float32),
        grid_spec=pltpu.PrefetchScalarGridSpec(
            num_scalar_prefetch=0,
            grid=grid,
            in_specs=[pl.BlockSpec((bn, bn), lambda i, k: (i, k))],
            out_specs=pl.BlockSpec((bn, 1), lambda i, k: (i, 0)),
            scratch_shapes=[pltpu.VMEM((bn, 1), jnp.float32)],
        ),
        compiler_params=pltpu.CompilerParams(
            dimension_semantics=("parallel", "arbitrary")),
    )(a_pad)


# ---------------------------------------------------------------------------
# Kernel 2: fused construction of
#   pre = c1*I + c2*adj                    (tile written per (i,k), diag only on i==k)
#   res = x + beta * adj @ x               (accumulated over k in f32 scratch)
# where adj tile = d_row * A_tile * d_col is built on the fly (never hits HBM).
#   grid = (N/bn row-blocks, N/bn col/reduction-blocks)
# ---------------------------------------------------------------------------
def _fused_pre_res_kernel(a_ref, dr_ref, dc_ref, x_ref,
                          pre_ref, res_ref, acc_ref,
                          *, alpha, beta, matmul_dtype):
    i = pl.program_id(0)
    k = pl.program_id(1)

    c1 = jnp.float32(beta + 1.0 / alpha)
    c2 = jnp.float32(1.0 - beta - 1.0 / alpha)
    bscale = jnp.float32(beta)

    @pl.when(k == 0)
    def _():
        acc_ref[...] = jnp.zeros_like(acc_ref)

    # normalized adjacency tile: D^-1/2 A D^-1/2   (VPU broadcast multiplies)
    adj = dr_ref[...] * a_ref[...] * dc_ref[...]          # (bn, bn) f32

    # ---- pre tile ----
    pre_ref[...] = c2 * adj

    @pl.when(i == k)
    def _():
        # identity contribution only in diagonal blocks (tile-local iota compare)
        r = jax.lax.broadcasted_iota(jnp.int32, pre_ref.shape, 0)
        c = jax.lax.broadcasted_iota(jnp.int32, pre_ref.shape, 1)
        pre_ref[...] += jnp.where(r == c, c1, jnp.float32(0.0))

    # ---- res accumulation: res = x + beta * adj @ x ----
    x_k = x_ref[...]                                       # (bn, F_pad)
    acc_ref[...] += bscale * jnp.dot(
        adj.astype(matmul_dtype), x_k.astype(matmul_dtype),
        preferred_element_type=jnp.float32)

    @pl.when(k == i)
    def _():
        # the "+ x" (identity) term: x rows of block k coincide with row-block i
        acc_ref[...] += x_k.astype(jnp.float32)

    @pl.when(k == pl.num_programs(1) - 1)
    def _():
        res_ref[...] = acc_ref[...].astype(res_ref.dtype)


def _fused_pre_res(a_pad, d, x_pad, alpha, beta, bn, matmul_dtype):
    n_pad = a_pad.shape[0]
    f_pad = x_pad.shape[1]
    d_row = d.reshape(n_pad, 1)
    d_col = d.reshape(1, n_pad)
    grid = (n_pad // bn, n_pad // bn)
    kernel = functools.partial(_fused_pre_res_kernel, alpha=alpha, beta=beta,
                               matmul_dtype=matmul_dtype)
    return pl.pallas_call(
        kernel,
        out_shape=(jax.ShapeDtypeStruct((n_pad, n_pad), jnp.float32),
                   jax.ShapeDtypeStruct((n_pad, f_pad), jnp.float32)),
        grid_spec=pltpu.PrefetchScalarGridSpec(
            num_scalar_prefetch=0,
            grid=grid,
            in_specs=[
                pl.BlockSpec((bn, bn), lambda i, k: (i, k)),      # raw A tile
                pl.BlockSpec((bn, 1), lambda i, k: (i, 0)),       # deg^-1/2 rows
                pl.BlockSpec((1, bn), lambda i, k: (0, k)),       # deg^-1/2 cols
                pl.BlockSpec((bn, f_pad), lambda i, k: (k, 0)),   # x (reduction rows)
            ],
            out_specs=(
                pl.BlockSpec((bn, bn), lambda i, k: (i, k)),      # pre (written each step)
                pl.BlockSpec((bn, f_pad), lambda i, k: (i, 0)),   # res (resident acc over k)
            ),
            scratch_shapes=[pltpu.VMEM((bn, f_pad), jnp.float32)],
        ),
        compiler_params=pltpu.CompilerParams(
            dimension_semantics=("parallel", "arbitrary")),
    )(a_pad, d_row, d_col, x_pad)


# ---------------------------------------------------------------------------
# Wrapper
# ---------------------------------------------------------------------------
@functools.partial(jax.jit,
                   static_argnames=("alpha", "beta", "block_n", "matmul_dtype"))
def gnnhf_conv(x, edge_index, *, alpha, beta, block_n=128,
               matmul_dtype=jnp.float32):
    """Pallas implementation of GNNHFConv.forward.

    x:          (N, F) float32 node features
    edge_index: (2, E) int32    COO edge list (self-loops added internally)
    block_n:    square tile size (128 suits v5e's 4x128^2 MXU; 256 for v6e/v7x)
    matmul_dtype: set to jnp.bfloat16 on v6e/v7x for full-rate MXU (f32 acc kept)
    """
    n, f = x.shape
    # --- glue: dense adjacency from edge_index (scatter has no clean Pallas path) ---
    src, dst = edge_index[0], edge_index[1]
    a = jnp.zeros((n, n), jnp.float32).at[src, dst].set(1.0)
    a = jnp.maximum(a, a.T)                                     # undirected
    a = jnp.minimum(a + jnp.eye(n, dtype=jnp.float32), 1.0)     # A + I

    bn = block_n
    n_pad = ((n + bn - 1) // bn) * bn
    f_pad = ((f + 127) // 128) * 128                            # lane-dense features
    a_pad = jnp.pad(a, ((0, n_pad - n), (0, n_pad - n)))
    x_pad = jnp.pad(x, ((0, n_pad - n), (0, f_pad - f)))

    d = _deg_rsqrt(a_pad, bn)                                   # Pallas: deg^-1/2
    pre_pad, res_pad = _fused_pre_res(a_pad, d, x_pad,          # Pallas: fused pre / res
                                      alpha, beta, bn, matmul_dtype)

    pre = pre_pad[:n, :n]
    res = res_pad[:n, :f]
    # TODO(synk): dense factorization/solve has no clean Pallas equivalent; done in JAX.
    # solve(pre, res) == inv(pre) @ res, avoiding the explicit N^3 inverse + extra matmul.
    return jnp.linalg.solve(pre, res)


# ---------------------------------------------------------------------------
# Pure-JAX reference mirroring the PyTorch module
# ---------------------------------------------------------------------------
def _reference(x, edge_index, alpha, beta):
    n = x.shape[0]
    src, dst = edge_index[0], edge_index[1]
    a = jnp.zeros((n, n), jnp.float32).at[src, dst].set(1.0)
    a = jnp.maximum(a, a.T)
    a = jnp.minimum(a + jnp.eye(n, dtype=jnp.float32), 1.0)
    deg = a.sum(axis=1)
    dinv = deg ** -0.5
    adj = dinv[:, None] * a * dinv[None, :]
    eye = jnp.eye(n, dtype=jnp.float32)
    pre = (beta + 1.0 / alpha) * eye + (1.0 - beta - 1.0 / alpha) * adj
    res = jnp.matmul(eye + beta * adj, x, precision=jax.lax.Precision.HIGHEST)
    return jnp.matmul(jnp.linalg.inv(pre), res,
                      precision=jax.lax.Precision.HIGHEST)


def _ring_graph(n, chord_step):
    src = jnp.arange(n, dtype=jnp.int32)
    dst = (src + 1) % n
    chord_src = jnp.arange(0, n, chord_step, dtype=jnp.int32)
    chord_dst = (chord_src + n // 2) % n
    return jnp.stack([jnp.concatenate([src, chord_src]),
                      jnp.concatenate([dst, chord_dst])])


if __name__ == "__main__":
    alpha, beta = 0.1, 0.5
    key = jax.random.PRNGKey(0)
    k1, k2 = jax.random.split(key)

    # ---- test 1: tiny graph (single tile) ----
    N1, F1 = 16, 32
    x1 = jax.random.normal(k1, (N1, F1), dtype=jnp.float32)
    e1 = _ring_graph(N1, 4)
    out1 = jax.block_until_ready(
        gnnhf_conv(x1, e1, alpha=alpha, beta=beta, block_n=128))
    ref1 = _reference(x1, e1, alpha, beta)
    assert out1.shape == (N1, F1)
    assert jnp.allclose(out1, ref1, atol=1e-4, rtol=1e-4), "mismatch (small) vs reference"

    # ---- test 2: larger graph exercising a 3x3 tile grid + N/F padding ----
    N2, F2 = 300, 48
    x2 = jax.random.normal(k2, (N2, F2), dtype=jnp.float32)
    e2 = _ring_graph(N2, 7)
    out2 = jax.block_until_ready(
        gnnhf_conv(x2, e2, alpha=alpha, beta=beta, block_n=128))
    ref2 = _reference(x2, e2, alpha, beta)
    assert out2.shape == (N2, F2)
    assert jnp.allclose(out2, ref2, atol=5e-4, rtol=5e-4), "mismatch (tiled) vs reference"

    print("KERNEL_OK")
</pallas_src>

<mosaic_0001>
module attributes {stable_mosaic.version = 11 : i64} {
  func.func @_deg_rsqrt_kernel(%arg0: i32, %arg1: i32, %arg2: memref<128x128xf32, #tpu.memory_space<vmem>>, %arg3: memref<128x1xf32, #tpu.memory_space<vmem>>, %arg4: memref<128x1xf32, #tpu.memory_space<vmem>>) attributes {dimension_semantics = [#tpu.dimension_semantics<parallel>, #tpu.dimension_semantics<arbitrary>], iteration_bounds = array<i64: 1, 1>, scalar_prefetch = 0 : i64, scratch_operands = 1 : i64, tpu.core_type = #tpu.core_type<tc>, window_params = [{transform_indices = @transform_0, window_bounds = array<i64: 128, 128>}, {transform_indices = @transform_1, window_bounds = array<i64: 128, 1>}]} {
    %c0_i32 = arith.constant 0 : i32
    %0 = arith.cmpi eq, %arg1, %c0_i32 : i32
    %1 = arith.extui %0 : i1 to i32
    %c0_i32_0 = arith.constant 0 : i32
    %2 = arith.cmpi ne, %1, %c0_i32_0 : i32
    scf.if %2 {
      %cst_8 = arith.constant 0.000000e+00 : f32
      %12 = vector.broadcast %cst_8 : f32 to vector<128x1xf32>
      %c0_9 = arith.constant 0 : index
      %c0_10 = arith.constant 0 : index
      %13 = vector.load %arg4[%c0_9, %c0_10] : memref<128x1xf32, #tpu.memory_space<vmem>>, vector<128x1xf32>
      tpu.vector_store %arg4[%c0_9, %c0_10], %12 {strides = array<i32>} : memref<128x1xf32, #tpu.memory_space<vmem>>, vector<128x1xf32>,
    } else {
    }
    %c0 = arith.constant 0 : index
    %c0_1 = arith.constant 0 : index
    %3 = vector.load %arg4[%c0, %c0_1] : memref<128x1xf32, #tpu.memory_space<vmem>>, vector<128x1xf32>
    %c0_2 = arith.constant 0 : index
    %c0_3 = arith.constant 0 : index
    %4 = vector.load %arg2[%c0_2, %c0_3] : memref<128x128xf32, #tpu.memory_space<vmem>>, vector<128x128xf32>
    %cst = arith.constant dense<0.000000e+00> : vector<128xf32>
    %5 = vector.multi_reduction <add>, %4, %cst [1] : vector<128x128xf32> to vector<128xf32>
    %6 = vector.shape_cast %5 : vector<128xf32> to vector<128x1xf32>
    %7 = arith.addf %3, %6 : vector<128x1xf32>
    %c0_4 = arith.constant 0 : index
    %c0_5 = arith.constant 0 : index
    %8 = vector.load %arg4[%c0_4, %c0_5] : memref<128x1xf32, #tpu.memory_space<vmem>>, vector<128x1xf32>
    tpu.vector_store %arg4[%c0_4, %c0_5], %7 {strides = array<i32>} : memref<128x1xf32, #tpu.memory_space<vmem>>, vector<128x1xf32>,
    %c0_i32_6 = arith.constant 0 : i32
    %9 = arith.cmpi eq, %arg1, %c0_i32_6 : i32
    %10 = arith.extui %9 : i1 to i32
    %c0_i32_7 = arith.constant 0 : i32
    %11 = arith.cmpi ne, %10, %c0_i32_7 : i32
    scf.if %11 {
      %c0_8 = arith.constant 0 : index
      %c0_9 = arith.constant 0 : index
      %12 = vector.load %arg4[%c0_8, %c0_9] : memref<128x1xf32, #tpu.memory_space<vmem>>, vector<128x1xf32>
      %cst_10 = arith.constant 1.000000e+00 : f32
      %13 = vector.broadcast %cst_10 : f32 to vector<128x1xf32>
      %14 = arith.maximumf %12, %13 : vector<128x1xf32>
      %15 = math.rsqrt %14 : vector<128x1xf32>
      %c0_11 = arith.constant 0 : index
      %c0_12 = arith.constant 0 : index
      %16 = vector.load %arg3[%c0_11, %c0_12] : memref<128x1xf32, #tpu.memory_space<vmem>>, vector<128x1xf32>
      tpu.vector_store %arg3[%c0_11, %c0_12], %15 {strides = array<i32>} : memref<128x1xf32, #tpu.memory_space<vmem>>, vector<128x1xf32>,
    } else {
    }
    return
  }
  func.func @transform_0(%arg0: i32, %arg1: i32) -> (i32, i32) {
    %c0_i32 = arith.constant 0 : i32
    return %arg0, %arg1 : i32, i32
  }
  func.func @transform_1(%arg0: i32, %arg1: i32) -> (i32, i32) {
    %c0_i32 = arith.constant 0 : i32
    %c0_i32_0 = arith.constant 0 : i32
    return %arg0, %c0_i32 : i32, i32
  }
}

module attributes {stable_mosaic.version = 11 : i64} {
  func.func @_fused_pre_res_kernel(%arg0: i32, %arg1: i32, %arg2: memref<128x128xf32, #tpu.memory_space<vmem>>, %arg3: memref<128x1xf32, #tpu.memory_space<vmem>>, %arg4: memref<1x128xf32, #tpu.memory_space<vmem>>, %arg5: memref<128x128xf32, #tpu.memory_space<vmem>>, %arg6: memref<128x128xf32, #tpu.memory_space<vmem>>, %arg7: memref<128x128xf32, #tpu.memory_space<vmem>>, %arg8: memref<128x128xf32, #tpu.memory_space<vmem>>) attributes {dimension_semantics = [#tpu.dimension_semantics<parallel>, #tpu.dimension_semantics<arbitrary>], iteration_bounds = array<i64: 1, 1>, scalar_prefetch = 0 : i64, scratch_operands = 1 : i64, tpu.core_type = #tpu.core_type<tc>, window_params = [{transform_indices = @transform_0, window_bounds = array<i64: 128, 128>}, {transform_indices = @transform_1, window_bounds = array<i64: 128, 1>}, {transform_indices = @transform_2, window_bounds = array<i64: 1, 128>}, {transform_indices = @transform_3, window_bounds = array<i64: 128, 128>}, {transform_indices = @transform_4, window_bounds = array<i64: 128, 128>}, {transform_indices = @transform_5, window_bounds = array<i64: 128, 128>}]} {
    %c0_i32 = arith.constant 0 : i32
    %0 = arith.cmpi eq, %arg1, %c0_i32 : i32
    %1 = arith.extui %0 : i1 to i32
    %c0_i32_0 = arith.constant 0 : i32
    %2 = arith.cmpi ne, %1, %c0_i32_0 : i32
    scf.if %2 {
      %cst_21 = arith.constant 0.000000e+00 : f32
      %29 = vector.broadcast %cst_21 : f32 to vector<128x128xf32>
      %c0_22 = arith.constant 0 : index
      %c0_23 = arith.constant 0 : index
      %30 = vector.load %arg8[%c0_22, %c0_23] : memref<128x128xf32, #tpu.memory_space<vmem>>, vector<128x128xf32>
      tpu.vector_store %arg8[%c0_22, %c0_23], %29 {strides = array<i32>} : memref<128x128xf32, #tpu.memory_space<vmem>>, vector<128x128xf32>,
    } else {
    }
    %c0 = arith.constant 0 : index
    %c0_1 = arith.constant 0 : index
    %3 = vector.load %arg3[%c0, %c0_1] : memref<128x1xf32, #tpu.memory_space<vmem>>, vector<128x1xf32>
    %c0_2 = arith.constant 0 : index
    %c0_3 = arith.constant 0 : index
    %4 = vector.load %arg2[%c0_2, %c0_3] : memref<128x128xf32, #tpu.memory_space<vmem>>, vector<128x128xf32>
    %5 = vector.broadcast %3 : vector<128x1xf32> to vector<128x128xf32>
    %6 = arith.mulf %5, %4 : vector<128x128xf32>
    %c0_4 = arith.constant 0 : index
    %c0_5 = arith.constant 0 : index
    %7 = vector.load %arg4[%c0_4, %c0_5] : memref<1x128xf32, #tpu.memory_space<vmem>>, vector<1x128xf32>
    %8 = vector.broadcast %7 : vector<1x128xf32> to vector<128x128xf32>
    %9 = arith.mulf %6, %8 : vector<128x128xf32>
    %cst = arith.constant -9.500000e+00 : f32
    %10 = vector.broadcast %cst : f32 to vector<128x128xf32>
    %11 = arith.mulf %10, %9 : vector<128x128xf32>
    %c0_6 = arith.constant 0 : index
    %c0_7 = arith.constant 0 : index
    %12 = vector.load %arg6[%c0_6, %c0_7] : memref<128x128xf32, #tpu.memory_space<vmem>>, vector<128x128xf32>
    tpu.vector_store %arg6[%c0_6, %c0_7], %11 {strides = array<i32>} : memref<128x128xf32, #tpu.memory_space<vmem>>, vector<128x128xf32>,
    %13 = arith.cmpi eq, %arg0, %arg1 : i32
    %14 = arith.extui %13 : i1 to i32
    %cst_8 = arith.constant 1.050000e+01 : f32
    %c0_i32_9 = arith.constant 0 : i32
    %15 = arith.cmpi ne, %14, %c0_i32_9 : i32
    scf.if %15 {
      %29 = tpu.iota {dimensions = array<i32: 0>} : vector<128x128xi32>
      %30 = tpu.iota {dimensions = array<i32: 1>} : vector<128x128xi32>
      %c0_21 = arith.constant 0 : index
      %c0_22 = arith.constant 0 : index
      %31 = vector.load %arg6[%c0_21, %c0_22] : memref<128x128xf32, #tpu.memory_space<vmem>>, vector<128x128xf32>
      %32 = arith.cmpi eq, %29, %30 : vector<128x128xi32>
      %cst_23 = arith.constant 0.000000e+00 : f32
      %33 = vector.broadcast %cst_8 : f32 to vector<128x128xf32>
      %34 = vector.broadcast %cst_23 : f32 to vector<128x128xf32>
      %35 = arith.select %32, %33, %34 : vector<128x128xi1>, vector<128x128xf32>
      %36 = arith.addf %31, %35 : vector<128x128xf32>
      %c0_24 = arith.constant 0 : index
      %c0_25 = arith.constant 0 : index
      %37 = vector.load %arg6[%c0_24, %c0_25] : memref<128x128xf32, #tpu.memory_space<vmem>>, vector<128x128xf32>
      tpu.vector_store %arg6[%c0_24, %c0_25], %36 {strides = array<i32>} : memref<128x128xf32, #tpu.memory_space<vmem>>, vector<128x128xf32>,
    } else {
    }
    %c0_10 = arith.constant 0 : index
    %c0_11 = arith.constant 0 : index
    %16 = vector.load %arg5[%c0_10, %c0_11] : memref<128x128xf32, #tpu.memory_space<vmem>>, vector<128x128xf32>
    %c0_12 = arith.constant 0 : index
    %c0_13 = arith.constant 0 : index
    %17 = vector.load %arg8[%c0_12, %c0_13] : memref<128x128xf32, #tpu.memory_space<vmem>>, vector<128x128xf32>
    %cst_14 = arith.constant dense<0.000000e+00> : vector<128x128xf32>
    %18 = tpu.matmul %9, %16, %cst_14 {dimension_numbers = #tpu.dot_dimension_numbers<[1], [0], [0], [1], [0, 0, 1, 1], [], []>} : vector<128x128xf32>, vector<128x128xf32>, vector<128x128xf32> -> vector<128x128xf32>
    %cst_15 = arith.constant 5.000000e-01 : f32
    %19 = vector.broadcast %cst_15 : f32 to vector<128x128xf32>
    %20 = arith.mulf %19, %18 : vector<128x128xf32>
    %21 = arith.addf %17, %20 : vector<128x128xf32>
    %c0_16 = arith.constant 0 : index
    %c0_17 = arith.constant 0 : index
    %22 = vector.load %arg8[%c0_16, %c0_17] : memref<128x128xf32, #tpu.memory_space<vmem>>, vector<128x128xf32>
    tpu.vector_store %arg8[%c0_16, %c0_17], %21 {strides = array<i32>} : memref<128x128xf32, #tpu.memory_space<vmem>>, vector<128x128xf32>,
    %23 = arith.cmpi eq, %arg1, %arg0 : i32
    %24 = arith.extui %23 : i1 to i32
    %c0_i32_18 = arith.constant 0 : i32
    %25 = arith.cmpi ne, %24, %c0_i32_18 : i32
    scf.if %25 {
      %c0_21 = arith.constant 0 : index
      %c0_22 = arith.constant 0 : index
      %29 = vector.load %arg8[%c0_21, %c0_22] : memref<128x128xf32, #tpu.memory_space<vmem>>, vector<128x128xf32>
      %30 = arith.addf %29, %16 : vector<128x128xf32>
      %c0_23 = arith.constant 0 : index
      %c0_24 = arith.constant 0 : index
      %31 = vector.load %arg8[%c0_23, %c0_24] : memref<128x128xf32, #tpu.memory_space<vmem>>, vector<128x128xf32>
      tpu.vector_store %arg8[%c0_23, %c0_24], %30 {strides = array<i32>} : memref<128x128xf32, #tpu.memory_space<vmem>>, vector<128x128xf32>,
    } else {
    }
    %c0_i32_19 = arith.constant 0 : i32
    %26 = arith.cmpi eq, %arg1, %c0_i32_19 : i32
    %27 = arith.extui %26 : i1 to i32
    %c0_i32_20 = arith.constant 0 : i32
    %28 = arith.cmpi ne, %27, %c0_i32_20 : i32
    scf.if %28 {
      %c0_21 = arith.constant 0 : index
      %c0_22 = arith.constant 0 : index
      %29 = vector.load %arg8[%c0_21, %c0_22] : memref<128x128xf32, #tpu.memory_space<vmem>>, vector<128x128xf32>
      %c0_23 = arith.constant 0 : index
      %c0_24 = arith.constant 0 : index
      %30 = vector.load %arg7[%c0_23, %c0_24] : memref<128x128xf32, #tpu.memory_space<vmem>>, vector<128x128xf32>
      tpu.vector_store %arg7[%c0_23, %c0_24], %29 {strides = array<i32>} : memref<128x128xf32, #tpu.memory_space<vmem>>, vector<128x128xf32>,
    } else {
    }
    return
  }
  func.func @transform_0(%arg0: i32, %arg1: i32) -> (i32, i32) {
    %c0_i32 = arith.constant 0 : i32
    return %arg0, %arg1 : i32, i32
  }
  func.func @transform_1(%arg0: i32, %arg1: i32) -> (i32, i32) {
    %c0_i32 = arith.constant 0 : i32
    %c0_i32_0 = arith.constant 0 : i32
    return %arg0, %c0_i32 : i32, i32
  }
  func.func @transform_2(%arg0: i32, %arg1: i32) -> (i32, i32) {
    %c0_i32 = arith.constant 0 : i32
    %c0_i32_0 = arith.constant 0 : i32
    return %c0_i32, %arg1 : i32, i32
  }
  func.func @transform_3(%arg0: i32, %arg1: i32) -> (i32, i32) {
    %c0_i32 = arith.constant 0 : i32
    %c0_i32_0 = arith.constant 0 : i32
    return %arg1, %c0_i32 : i32, i32
  }
  func.func @transform_4(%arg0: i32, %arg1: i32) -> (i32, i32) {
    %c0_i32 = arith.constant 0 : i32
    return %arg0, %arg1 : i32, i32
  }
  func.func @transform_5(%arg0: i32, %arg1: i32) -> (i32, i32) {
    %c0_i32 = arith.constant 0 : i32
    %c0_i32_0 = arith.constant 0 : i32
    return %arg0, %c0_i32 : i32, i32
  }
}

</mosaic_0001>

<llo_original>
// kernel: custom-call.8
$region0: #{custom-call.8}
  %s0 = inlined_call_operand.vmem [shape: f32[16,16], index: 0, kind: input, shape index: {}]
  %s1 = inlined_call_operand.vmem [shape: f32[16,16], index: 1, kind: output, shape index: {0}]
  %s2 = inlined_call_operand.hbm [shape: s32[16], index: 2, kind: output, shape index: {1}]
  %s3 = inlined_call_operand.vmem [shape: s32[16], index: 3, kind: output, shape index: {2}]
  %4 = xla_tuple %s1, %s2, %s3
  $region1: #{custom-call.8} parent=0
    #allocation0 [shape = 'u8[8192]{0}', space=vmem, size = 0x2000, scoped, tag = 'operand span for operand 0']
    #allocation1 [shape = 'u8[8192]{0}', space=vmem, size = 0x2000, scoped, tag = 'operand span for operand 1']
    #allocation2 [shape = 'u8[4096]{0}', space=vmem, size = 0x1000, scoped, tag = 'operand span for operand 2']
    #allocation3 [shape = 'u8[512]{0}', space=vmem, size = 0x400, scoped, tag = 'packed  for operand 2']
    #allocation4 [shape = 's32[1]{0}', space=sflag, size = 0x4, scoped, tag = 'scoped memory for custom-call.8']
    #allocation5 [shape = 'u8[4096]{0}', space=vmem, size = 0x1000, scoped, tag = 'operand span for operand 3']
    #allocation6 [shape = 'u8[512]{0}', space=vmem, size = 0x400, scoped, tag = 'packed  for operand 3']
    #allocation7 [shape = 's32[16,128]{1,0}', space=vmem, size = 0x2000, scoped, tag = 'scratch for permutations']
    %5 = vsyncpa [#allocation4], 0
    // Predicated region
    $region2: #{custom-call.8} parent=1 // pred_check
      _
    $region3: #{custom-call.8} parent=1 // pred_check_branch
      %7 = sbr.rel (0) target = $region5
    $region4: #{custom-call.8} parent=1 // pred_region
      %p9 = scmp.gt.s32.totalorder 2, 0
      // Predicated region
      $region6: #{custom-call.8} parent=4 // pred_check
        %p10 = pneg %p9
      $region7: #{custom-call.8} parent=4 // pred_check_branch
        %12 = sbr.rel (%p10) target = $region9
      $region8: #{custom-call.8} parent=4 // pred_region
        %s13 = ssub.s32 2, 1
        %s14 = smul.u32 %s13, 8
        %s15 = scalar_lea.vmem %s0, %s14
        %v16 = vld [vmem:[%s0] sm:$0xff]
        // While loop
        $region10: #{custom-call.8} parent=8 // loop_pre_header
          _
        $region11: #{custom-call.8} parent=8 // loop_header
          %s17 = sphi %s0, %s39
          %s18 = sphi [#allocation0], %s40
          %v19 = vphi %v16, %v41
          %s20 = ssub.s32 %s15, 64
          %p21 = scmp.gt.s32.totalorder %s17, %s20
        $region12: #{custom-call.8} parent=8 // loop_header_branch
          %23 = sbr.rel (%p21) target = $region16
        $region13: #{custom-call.8} parent=8 // loop_body
          %24 = vst [vmem:[%s18] sm:$0xff] %v19
          %v25 = vld [vmem:[%s17 + $0x8] sm:$0xff]
          %26 = vst [vmem:[%s18 + $0x8] sm:$0xff] %v25
          %v27 = vld [vmem:[%s17 + $0x10] sm:$0xff]
          %28 = vst [vmem:[%s18 + $0x10] sm:$0xff] %v27
          %v29 = vld [vmem:[%s17 + $0x18] sm:$0xff]
          %30 = vst [vmem:[%s18 + $0x18] sm:$0xff] %v29
          %v31 = vld [vmem:[%s17 + $0x20] sm:$0xff]
          %32 = vst [vmem:[%s18 + $0x20] sm:$0xff] %v31
          %v33 = vld [vmem:[%s17 + $0x28] sm:$0xff]
          %34 = vst [vmem:[%s18 + $0x28] sm:$0xff] %v33
          %v35 = vld [vmem:[%s17 + $0x30] sm:$0xff]
          %36 = vst [vmem:[%s18 + $0x30] sm:$0xff] %v35
          %v37 = vld [vmem:[%s17 + $0x38] sm:$0xff]
          %38 = vst [vmem:[%s18 + $0x38] sm:$0xff] %v37
        $region14: #{custom-call.8} parent=8 // loop_footer
          %s39 = scalar_lea.vmem %s17, 64
          %s40 = scalar_lea.vmem %s18, 64
          %v41 = vld [vmem:[%s17 + $0x40] sm:$0xff]
        $region15: #{custom-call.8} parent=8 // loop_footer_branch
          %42 = sbr.rel target = $region11
        $region16: #{custom-call.8} parent=8 // loop_exit
          _
        // While loop
        $region17: #{custom-call.8} parent=8 // loop_pre_header
          _
        $region18: #{custom-call.8} parent=8 // loop_header
          %s43 = sphi %s17, %s51
          %s44 = sphi %s18, %s52
          %v45 = vphi %v19, %v45
          %p46 = scmp.gt.s32.totalorder %s43, %s15
        $region19: #{custom-call.8} parent=8 // loop_header_branch
          %48 = sbr.rel (%p46) target = $region23
        $region20: #{custom-call.8} parent=8 // loop_body
          %v49 = vld [vmem:[%s43] sm:$0xff]
          %50 = vst [vmem:[%s44] sm:$0xff] %v49
        $region21: #{custom-call.8} parent=8 // loop_footer
          %s51 = scalar_lea.vmem %s43, 8
          %s52 = scalar_lea.vmem %s44, 8
        $region22: #{custom-call.8} parent=8 // loop_footer_branch
          %53 = sbr.rel target = $region18
        $region23: #{custom-call.8} parent=8 // loop_exit
          _
      $region9: #{custom-call.8} parent=4 // pred_fallthru
        _
      %s55 = ssub.s32 1, 1
      %s56 = smul.u32 2, 8
      %s57 = scalar_lea.vmem [#allocation0], %s56
      %s58 = smul.u32 2, 8
      %s59 = scalar_lea.vmem %s0, %s58
      %v60 = vld [vmem:[%s59] sm:%s55]
      %61 = vst [vmem:[%s57] sm:%s55] %v60
    $region5: #{custom-call.8} parent=1 // pred_fallthru
      _
    %v62 = vld [vmem:[#allocation0] sm:$0xff]
    %63 = vst [vmem:[#allocation1] sm:$0xff] %v62
    %s64 = scalar_lea.vmem [#allocation1], 8
    %s65 = scalar_lea.vmem [#allocation0], 8
    %v66 = vld [vmem:[%s65] sm:$0xff]
    %67 = vst [vmem:[%s64] sm:$0xff] %v66
    %68 = vst [vmem:[#allocation2] sm:$0x1] 0
    %v69 = vlaneseq
    %v70 = vshrl.u32 %v69, 7
    %v71 = vmov %v70
    loop: start=0, step=1, limit=2
    $region24: #{custom-call.8} parent=1 // loop_pre_header
      _
    $region25: #{custom-call.8} parent=1 // loop_header
      %s73 = sphi 0, %s77
      %p74 = scmp.ge.s32.totalorder %s73, 2
    $region26: #{custom-call.8} parent=1 // loop_header_branch
      %76 = sbr.rel (%p74) target = $region30
    $region27: #{custom-call.8} parent=1 // loop_body
      %s78 = smul.addr %s73, 8
      %s79 = scalar_lea.vmem [#allocation7], %s78
      %s80 = smul.u32 %s73, 8
      %v81 = vstv %s80
      %v82 = vadd.s32 %v71, %v81
      %83 = vst [vmem:[%s79] sm:$0xff] %v82
    $region28: #{custom-call.8} parent=1 // loop_footer
      %s77 = sadd.s32 1, %s73
    $region29: #{custom-call.8} parent=1 // loop_footer_branch
      %72 = sbr.rel target = $region25
    $region30: #{custom-call.8} parent=1 // loop_exit
      _
    loop: start=0, step=1, limit=16
    $region31: #{custom-call.8} parent=1 // loop_pre_header
      _
    $region32: #{custom-call.8} parent=1 // loop_header
      %s85 = sphi 0, %s89
      %p86 = scmp.ge.s32.totalorder %s85, 16
    $region33: #{custom-call.8} parent=1 // loop_header_branch
      %88 = sbr.rel (%p86) target = $region37
    $region34: #{custom-call.8} parent=1 // loop_body
      %v90 = vstv %s85
      %v91 = vlaneseq
      %v92 = vshrl.u32 %v91, 7
      %v93 = vmov %v92
      %v94 = vld [vmem:[#allocation1] sm:$0xff]
      %v95 = vand.u32 2147483647, %v94
      %v97 = vstv %s85
      %vm98 = vcmp.ge.s32.totalorder %v93, %v97
      %vm99 = vcmp.lt.s32.totalorder %v93, 16
      %vm100 = vmand %vm98, %vm99
      %vm101 = vcmp.lt.f32.partialorder -inf, %v95
      %vm102 = vmand %vm100, %vm101
      %v103 = vsel %vm102, %v93, %v90
      %v104 = vsel %vm102, %v95, -inf
      %s105 = scalar_lea.vmem [#allocation1], 8
      %v106 = vld [vmem:[%s105] sm:$0xff]
      %v107 = vand.u32 2147483647, %v106
      %v108 = vadd.s32 %v93, 8
      %v109 = vstv %s85
      %vm110 = vcmp.ge.s32.totalorder %v108, %v109
      %vm111 = vcmp.lt.s32.totalorder %v108, 16
      %vm112 = vmand %vm110, %vm111
      %vm113 = vcmp.lt.f32.partialorder %v104, %v107
      %vm114 = vmand %vm112, %vm113
      %v115 = vsel %vm114, %v108, %v103
      %v116 = vsel %vm114, %v107, %v104
      %v117 = vrot.slane %v116, 1
      %v118 = vrot.slane %v115, 1
      %vm119 = vcmp.ge.f32.partialorder %v117, %v116
      %v120 = vsel %vm119, %v117, %v116
      %v121 = vsel %vm119, %v118, %v115
      %v122 = vrot.slane %v117, 1
      %v123 = vrot.slane %v118, 1
      %vm124 = vcmp.ge.f32.partialorder %v122, %v120
      %v125 = vsel %vm124, %v122, %v120
      %v126 = vsel %vm124, %v123, %v121
      %v127 = vrot.slane %v122, 1
      %v128 = vrot.slane %v123, 1
      %vm129 = vcmp.ge.f32.partialorder %v127, %v125
      %v130 = vsel %vm129, %v127, %v125
      %v131 = vsel %vm129, %v128, %v126
      %v132 = vrot.slane %v127, 1
      %v133 = vrot.slane %v128, 1
      %vm134 = vcmp.ge.f32.partialorder %v132, %v130
      %v135 = vsel %vm134, %v132, %v130
      %v136 = vsel %vm134, %v133, %v131
      %v137 = vrot.slane %v132, 1
      %v138 = vrot.slane %v133, 1
      %vm139 = vcmp.ge.f32.partialorder %v137, %v135
      %v140 = vsel %vm139, %v137, %v135
      %v141 = vsel %vm139, %v138, %v136
      %v142 = vrot.slane %v137, 1
      %v143 = vrot.slane %v138, 1
      %vm144 = vcmp.ge.f32.partialorder %v142, %v140
      %v145 = vsel %vm144, %v142, %v140
      %v146 = vsel %vm144, %v143, %v141
      %v147 = vrot.slane %v142, 1
      %v148 = vrot.slane %v143, 1
      %vm149 = vcmp.ge.f32.partialorder %v147, %v145
      %v150 = vsel %vm149, %v147, %v145
      %v151 = vsel %vm149, %v148, %v146
      %s152 = ssub.s32 128, %s85
      %153 = vrot.lane.b32.xlu0 %v151, %s152
      %v154 = vpop.permute.xlu0 %153
      %s155 = vtos %v154
      %v156 = vstv %s85
      %v157 = vlaneseq
      %v158 = vand.u32 %v157, 127
      %vm159 = vcmp.eq.s32.totalorder %v158, %v156
      %v160 = vstv %s155
      %v161 = vld [vmem:[#allocation2] ss:$0 sm:$0xff]
      %v162 = vsel %vm159, %v160, %v161
      %163 = vst [vmem:[#allocation2] sm:$0x1] %v162
      %s164 = scalar_lea.vmem [#allocation1], %s85
      %s165 = scalar_lea.vmem [#allocation1], %s155
      %v166 = vld [vmem:[%s164] ss:$0 sm:$0xff]
      %v167 = vld [vmem:[%s165] ss:$0 sm:$0xff]
      %168 = vst [vmem:[%s165] sm:$0x1] %v166
      %169 = vst [vmem:[%s164] sm:$0x1] %v167
      %s170 = scalar_lea.vmem [#allocation7], %s85
      %s171 = scalar_lea.vmem [#allocation7], %s155
      %v172 = vld [vmem:[%s170] ss:$0 sm:$0xff]
      %v173 = vld [vmem:[%s171] ss:$0 sm:$0xff]
      %174 = vst [vmem:[%s171] sm:$0x1] %v172
      %175 = vst [vmem:[%s170] sm:$0x1] %v173
      %vm176 = vcmp.ne.f32.partialorder %v167, 0.0
      %vm177 = vmand %vm159, %vm176
      %v178 = vsel %vm177, %v167, 1.0
      %v179 = vlaneseq
      %v180 = vand.u32 %v179, 127
      %v181 = vstv %s85
      %vm182 = vcmp.gt.s32.totalorder %v180, %v181
      %v183 = vsel %vm182, %v167, 0.0
      %v184 = vlaneseq
      %v185 = vshrl.u32 %v184, 7
      %v186 = vmov %v185
      %v187 = vld [vmem:[#allocation1] sm:$0xff]
      %v189 = vstv %s85
      %vm190 = vcmp.gt.s32.totalorder %v186, %v189
      %v191 = vsel %vm190, %v178, 1.0
      %v192 = vrcp.pop %v191
      %v193 = vmul.f32 %v191, %v192
      %v194 = vsub.f32 1.0, %v193
      %v195 = vmul.f32 %v192, %v194
      %v196 = vadd.f32 %v192, %v195
      %vm197 = vweird.f32 %v191
      %vm198 = vweird.f32 %v192
      %vm199 = vmor %vm197, %vm198
      %v200 = vsel %vm199, %v192, %v196
      %v201 = vand.u32 2147483647, %v191
      %vm202 = vcmp.eq.f32.partialorder %v201, 8.507059e+37
      %v203 = vand.u32 %v191, 2147483648
      %v204 = vor.u32 1.1754944e-38, %v203
      %v205 = vsel %vm202, %v204, %v200
      %v206 = vmul.f32 %v187, %v205
      %vm207 = vmand %vm190, %vm159
      %v208 = vsel %vm207, %v206, 0.0
      %209 = vadd.xlane.f32.xlu0 %v208
      %v210 = vpop.xlane.xlu0 %209
      %v211 = vmul.f32 %v210, %v183
      %v212 = vsub.f32 %v206, %v211
      %213 = vst [vmem:[#allocation1] sm:$0xff] %v212
      %s214 = scalar_lea.vmem [#allocation1], 8
      %v215 = vld [vmem:[%s214] sm:$0xff]
      %v216 = vadd.s32 %v186, 8
      %v217 = vstv %s85
      %vm218 = vcmp.gt.s32.totalorder %v216, %v217
      %v219 = vsel %vm218, %v178, 1.0
      %v220 = vrcp.pop %v219
      %v221 = vmul.f32 %v219, %v220
      %v222 = vsub.f32 1.0, %v221
      %v223 = vmul.f32 %v220, %v222
      %v224 = vadd.f32 %v220, %v223
      %vm225 = vweird.f32 %v219
      %vm226 = vweird.f32 %v220
      %vm227 = vmor %vm225, %vm226
      %v228 = vsel %vm227, %v220, %v224
      %v229 = vand.u32 2147483647, %v219
      %vm230 = vcmp.eq.f32.partialorder %v229, 8.507059e+37
      %v231 = vand.u32 %v219, 2147483648
      %v232 = vor.u32 1.1754944e-38, %v231
      %v233 = vsel %vm230, %v232, %v228
      %v234 = vmul.f32 %v215, %v233
      %vm235 = vmand %vm218, %vm159
      %v236 = vsel %vm235, %v234, 0.0
      %237 = vadd.xlane.f32.xlu0 %v236
      %v238 = vpop.xlane.xlu0 %237
      %v239 = vmul.f32 %v238, %v183
      %v240 = vsub.f32 %v234, %v239
      %241 = vst [vmem:[%s214] sm:$0xff] %v240
    $region35: #{custom-call.8} parent=1 // loop_footer
      %s89 = sadd.s32 1, %s85
    $region36: #{custom-call.8} parent=1 // loop_footer_branch
      %84 = sbr.rel target = $region32
    $region37: #{custom-call.8} parent=1 // loop_exit
      _
    %v242 = vld [vmem:[#allocation7] sm:$0xff]
    %s243 = scalar_lea.vmem [#allocation7], 8
    %v244 = vld [vmem:[%s243] sm:$0xff]
    %s245 = scalar_lea.vmem [#allocation7], 16
    %s246 = scalar_lea.vmem [#allocation7], 24
    %s247 = scalar_lea.vmem [#allocation7], 32
    %s248 = scalar_lea.vmem [#allocation7], 40
    %s249 = scalar_lea.vmem [#allocation7], 48
    %s250 = scalar_lea.vmem [#allocation7], 56
    %s251 = scalar_lea.vmem [#allocation7], 64
    %s252 = scalar_lea.vmem [#allocation7], 72
    %s253 = scalar_lea.vmem [#allocation7], 80
    %s254 = scalar_lea.vmem [#allocation7], 88
    %s255 = scalar_lea.vmem [#allocation7], 96
    %s256 = scalar_lea.vmem [#allocation7], 104
    %s257 = scalar_lea.vmem [#allocation7], 112
    %s258 = scalar_lea.vmem [#allocation7], 120
    %259 = vxpose.xlu0.b32.start [1/16] %v242, 128
    %260 = vxpose.xlu0.b32.cont [2/16] %v244, 128
    %261 = vxpose.xlu0.b32.cont [3/16] 0, 128
    %262 = vxpose.xlu0.b32.cont [4/16] 0, 128
    %263 = vxpose.xlu0.b32.cont [5/16] 0, 128
    %264 = vxpose.xlu0.b32.cont [6/16] 0, 128
    %265 = vxpose.xlu0.b32.cont [7/16] 0, 128
    %266 = vxpose.xlu0.b32.cont [8/16] 0, 128
    %267 = vxpose.xlu0.b32.cont [9/16] 0, 128
    %268 = vxpose.xlu0.b32.cont [10/16] 0, 128
    %269 = vxpose.xlu0.b32.cont [11/16] 0, 128
    %270 = vxpose.xlu0.b32.cont [12/16] 0, 128
    %271 = vxpose.xlu0.b32.cont [13/16] 0, 128
    %272 = vxpose.xlu0.b32.cont [14/16] 0, 128
    %273 = vxpose.xlu0.b32.cont [15/16] 0, 128
    %274 = vxpose.xlu0.b32.end [16/16] 0, 128
    %v275 = vpop.trf.xlu0
    %v276 = vpop.trf.xlu0
    %v277 = vpop.trf.xlu0
    %v278 = vpop.trf.xlu0
    %v279 = vpop.trf.xlu0
    %v280 = vpop.trf.xlu0
    %v281 = vpop.trf.xlu0
    %v282 = vpop.trf.xlu0
    %v283 = vpop.trf.xlu0
    %v284 = vpop.trf.xlu0
    %v285 = vpop.trf.xlu0
    %v286 = vpop.trf.xlu0
    %v287 = vpop.trf.xlu0
    %v288 = vpop.trf.xlu0
    %v289 = vpop.trf.xlu0
    %v290 = vpop.trf.xlu0
    %291 = vst [vmem:[#allocation5] sm:$0x1] %v275
    %s293 = ssub.s32 2, 1
    %v294 = vld [vmem:[#allocation2] sm:%s293]
    %s296 = ssub.s32 2, 1
    %297 = vst [vmem:[#allocation3] sm:%s296] %v294
    %s299 = ssub.s32 2, 1
    %v300 = vld [vmem:[#allocation5] sm:%s299]
    %s302 = ssub.s32 2, 1
    %303 = vst [vmem:[#allocation6] sm:%s302] %v300
    // Predicated region
    $region38: #{custom-call.8} parent=1 // pred_check
      _
    $region39: #{custom-call.8} parent=1 // pred_check_branch
      %305 = sbr.rel (0) target = $region41
    $region40: #{custom-call.8} parent=1 // pred_region
      %p307 = scmp.gt.s32.totalorder 2, 0
      // Predicated region
      $region42: #{custom-call.8} parent=40 // pred_check
        %p308 = pneg %p307
      $region43: #{custom-call.8} parent=40 // pred_check_branch
        %310 = sbr.rel (%p308) target = $region45
      $region44: #{custom-call.8} parent=40 // pred_region
        %s311 = ssub.s32 2, 1
        %s312 = smul.u32 %s311, 8
        %s313 = scalar_lea.vmem [#allocation1], %s312
        %v314 = vld [vmem:[#allocation1] sm:$0xff]
        // While loop
        $region46: #{custom-call.8} parent=44 // loop_pre_header
          _
        $region47: #{custom-call.8} parent=44 // loop_header
          %s315 = sphi [#allocation1], %s337
          %s316 = sphi %s1, %s338
          %v317 = vphi %v314, %v339
          %s318 = ssub.s32 %s313, 64
          %p319 = scmp.gt.s32.totalorder %s315, %s318
        $region48: #{custom-call.8} parent=44 // loop_header_branch
          %321 = sbr.rel (%p319) target = $region52
        $region49: #{custom-call.8} parent=44 // loop_body
          %322 = vst [vmem:[%s316] sm:$0xff] %v317
          %v323 = vld [vmem:[%s315 + $0x8] sm:$0xff]
          %324 = vst [vmem:[%s316 + $0x8] sm:$0xff] %v323
          %v325 = vld [vmem:[%s315 + $0x10] sm:$0xff]
          %326 = vst [vmem:[%s316 + $0x10] sm:$0xff] %v325
          %v327 = vld [vmem:[%s315 + $0x18] sm:$0xff]
          %328 = vst [vmem:[%s316 + $0x18] sm:$0xff] %v327
          %v329 = vld [vmem:[%s315 + $0x20] sm:$0xff]
          %330 = vst [vmem:[%s316 + $0x20] sm:$0xff] %v329
          %v331 = vld [vmem:[%s315 + $0x28] sm:$0xff]
          %332 = vst [vmem:[%s316 + $0x28] sm:$0xff] %v331
          %v333 = vld [vmem:[%s315 + $0x30] sm:$0xff]
          %334 = vst [vmem:[%s316 + $0x30] sm:$0xff] %v333
          %v335 = vld [vmem:[%s315 + $0x38] sm:$0xff]
          %336 = vst [vmem:[%s316 + $0x38] sm:$0xff] %v335
        $region50: #{custom-call.8} parent=44 // loop_footer
          %s337 = scalar_lea.vmem %s315, 64
          %s338 = scalar_lea.vmem %s316, 64
          %v339 = vld [vmem:[%s315 + $0x40] sm:$0xff]
        $region51: #{custom-call.8} parent=44 // loop_footer_branch
          %340 = sbr.rel target = $region47
        $region52: #{custom-call.8} parent=44 // loop_exit
          _
        // While loop
        $region53: #{custom-call.8} parent=44 // loop_pre_header
          _
        $region54: #{custom-call.8} parent=44 // loop_header
          %s341 = sphi %s315, %s349
          %s342 = sphi %s316, %s350
          %v343 = vphi %v317, %v343
          %p344 = scmp.gt.s32.totalorder %s341, %s313
        $region55: #{custom-call.8} parent=44 // loop_header_branch
          %346 = sbr.rel (%p344) target = $region59
        $region56: #{custom-call.8} parent=44 // loop_body
          %v347 = vld [vmem:[%s341] sm:$0xff]
          %348 = vst [vmem:[%s342] sm:$0xff] %v347
        $region57: #{custom-call.8} parent=44 // loop_footer
          %s349 = scalar_lea.vmem %s341, 8
          %s350 = scalar_lea.vmem %s342, 8
        $region58: #{custom-call.8} parent=44 // loop_footer_branch
          %351 = sbr.rel target = $region54
        $region59: #{custom-call.8} parent=44 // loop_exit
          _
      $region45: #{custom-call.8} parent=40 // pred_fallthru
        _
      %s353 = ssub.s32 1, 1
      %s354 = smul.u32 2, 8
      %s355 = scalar_lea.vmem %s1, %s354
      %s356 = smul.u32 2, 8
      %s357 = scalar_lea.vmem [#allocation1], %s356
      %v358 = vld [vmem:[%s357] sm:%s353]
      %359 = vst [vmem:[%s355] sm:%s353] %v358
    $region41: #{custom-call.8} parent=1 // pred_fallthru
      _
    // Predicated region
    $region60: #{custom-call.8} parent=1 // pred_check
      _
    $region61: #{custom-call.8} parent=1 // pred_check_branch
      %361 = sbr.rel (0) target = $region63
    $region62: #{custom-call.8} parent=1 // pred_region
      %363 = vsyncadd [#allocation4], 0
      %s365 = sshll.u32 [#allocation3], 4
      %s366 = int_to_ptr.vmem [resolvable:$true] %s365
      %s367 = sshll.u32 %s2, 4
      %s368 = int_to_ptr.hbm [resolvable:$true] %s367
      %370 = dma.vmem_to_hbm [thread:$0]  %s366, 16, %s368, [#allocation4]
    $region63: #{custom-call.8} parent=1 // pred_fallthru
      _
    // Predicated region
    $region64: #{custom-call.8} parent=1 // pred_check
      _
    $region65: #{custom-call.8} parent=1 // pred_check_branch
      %372 = sbr.rel (0) target = $region67
    $region66: #{custom-call.8} parent=1 // pred_region
      // Predicated region
      $region68: #{custom-call.8} parent=66 // pred_check
        _
      $region69: #{custom-call.8} parent=66 // pred_check_branch
        %374 = sbr.rel (0) target = $region71
      $region70: #{custom-call.8} parent=66 // pred_region
        %p376 = scmp.gt.s32.totalorder 0, 0
        // Predicated region
        $region72: #{custom-call.8} parent=70 // pred_check
          %p377 = pneg %p376
        $region73: #{custom-call.8} parent=70 // pred_check_branch
          %379 = sbr.rel (%p377) target = $region75
        $region74: #{custom-call.8} parent=70 // pred_region
          %s380 = ssub.s32 0, 1
          %s381 = smul.u32 %s380, 8
          %s382 = scalar_lea.vmem [#allocation6], %s381
          %v383 = vld [vmem:[#allocation6] sm:$0xff]
          // While loop
          $region76: #{custom-call.8} parent=74 // loop_pre_header
            _
          $region77: #{custom-call.8} parent=74 // loop_header
            %s384 = sphi [#allocation6], %s406
            %s385 = sphi %s3, %s407
            %v386 = vphi %v383, %v408
            %s387 = ssub.s32 %s382, 64
            %p388 = scmp.gt.s32.totalorder %s384, %s387
          $region78: #{custom-call.8} parent=74 // loop_header_branch
            %390 = sbr.rel (%p388) target = $region82
          $region79: #{custom-call.8} parent=74 // loop_body
            %391 = vst [vmem:[%s385] sm:$0xff] %v386
            %v392 = vld [vmem:[%s384 + $0x8] sm:$0xff]
            %393 = vst [vmem:[%s385 + $0x8] sm:$0xff] %v392
            %v394 = vld [vmem:[%s384 + $0x10] sm:$0xff]
            %395 = vst [vmem:[%s385 + $0x10] sm:$0xff] %v394
            %v396 = vld [vmem:[%s384 + $0x18] sm:$0xff]
            %397 = vst [vmem:[%s385 + $0x18] sm:$0xff] %v396
            %v398 = vld [vmem:[%s384 + $0x20] sm:$0xff]
            %399 = vst [vmem:[%s385 + $0x20] sm:$0xff] %v398
            %v400 = vld [vmem:[%s384 + $0x28] sm:$0xff]
            %401 = vst [vmem:[%s385 + $0x28] sm:$0xff] %v400
            %v402 = vld [vmem:[%s384 + $0x30] sm:$0xff]
            %403 = vst [vmem:[%s385 + $0x30] sm:$0xff] %v402
            %v404 = vld [vmem:[%s384 + $0x38] sm:$0xff]
            %405 = vst [vmem:[%s385 + $0x38] sm:$0xff] %v404
          $region80: #{custom-call.8} parent=74 // loop_footer
            %s406 = scalar_lea.vmem %s384, 64
            %s407 = scalar_lea.vmem %s385, 64
            %v408 = vld [vmem:[%s384 + $0x40] sm:$0xff]
          $region81: #{custom-call.8} parent=74 // loop_footer_branch
            %409 = sbr.rel target = $region77
          $region82: #{custom-call.8} parent=74 // loop_exit
            _
          // While loop
          $region83: #{custom-call.8} parent=74 // loop_pre_header
            _
          $region84: #{custom-call.8} parent=74 // loop_header
            %s410 = sphi %s384, %s418
            %s411 = sphi %s385, %s419
            %v412 = vphi %v386, %v412
            %p413 = scmp.gt.s32.totalorder %s410, %s382
          $region85: #{custom-call.8} parent=74 // loop_header_branch
            %415 = sbr.rel (%p413) target = $region89
          $region86: #{custom-call.8} parent=74 // loop_body
            %v416 = vld [vmem:[%s410] sm:$0xff]
            %417 = vst [vmem:[%s411] sm:$0xff] %v416
          $region87: #{custom-call.8} parent=74 // loop_footer
            %s418 = scalar_lea.vmem %s410, 8
            %s419 = scalar_lea.vmem %s411, 8
          $region88: #{custom-call.8} parent=74 // loop_footer_branch
            %420 = sbr.rel target = $region84
          $region89: #{custom-call.8} parent=74 // loop_exit
            _
        $region75: #{custom-call.8} parent=70 // pred_fallthru
          _
        %s422 = ssub.s32 2, 1
        %s423 = smul.u32 0, 8
        %s424 = scalar_lea.vmem %s3, %s423
        %s425 = smul.u32 0, 8
        %s426 = scalar_lea.vmem [#allocation6], %s425
        %v427 = vld [vmem:[%s426] sm:%s422]
        %428 = vst [vmem:[%s424] sm:%s422] %v427
      $region71: #{custom-call.8} parent=66 // pred_fallthru
        _
    $region67: #{custom-call.8} parent=1 // pred_fallthru
      _
    // Predicated region
    $region90: #{custom-call.8} parent=1 // pred_check
      _
    $region91: #{custom-call.8} parent=1 // pred_check_branch
      %430 = sbr.rel (0) target = $region93
    $region92: #{custom-call.8} parent=1 // pred_region
      %432 = dma.done [#allocation4], 16
    $region93: #{custom-call.8} parent=1 // pred_fallthru
      _
    // Predicated region
    $region94: #{custom-call.8} parent=1 // pred_check
      _
    $region95: #{custom-call.8} parent=1 // pred_check_branch
      %434 = sbr.rel (0) target = $region97
    $region96: #{custom-call.8} parent=1 // pred_region
      _
    $region97: #{custom-call.8} parent=1 // pred_fallthru
      _
    %435 = vsyncpa [#allocation4], 1

// kernel: gnnhf_conv.2
$region0: #{gnnhf_conv.2}
  #allocation0 [shape = 'u32[]', space=smem, size = 0x4, offset = 0x4, fixed_abs, tag = 'smem constant byte address 0x4 - core index']
  #allocation1 [shape = 'u32[72,128]{1,0:T(1,128)}', space=vmem, size = 0x9000, scoped, tag = 'internal scratch']
  #allocation2 [shape = 'f32[128,1]{1,0:T(8,128)}', space=vmem, size = 0x10000, scoped, tag = 'scratch operand']
  %s0 = inlined_call_operand.vmem [shape: f32[128,128], index: 0, kind: input, shape index: {}]
  %s1 = inlined_call_operand.vmem [shape: f32[128,1], index: 1, kind: output, shape index: {}]
  %s2 = sld [smem:[#allocation0]]
  $region22: #{gnnhf_conv.2} parent=0
    _
  %s4 = ssub.s32 1, %s2
  %s5 = scalar_select 0, %s4, %s2
  // Predicated region
  $region2: #{gnnhf_conv.2} parent=0 // pred_check
    _
  $region3: #{gnnhf_conv.2} parent=0 // pred_check_branch
    %7 = sbr.rel (0) target = $region5
  $region4: #{gnnhf_conv.2} parent=0 // pred_region
    _
  $region5: #{gnnhf_conv.2} parent=0 // pred_fallthru
    _
  %p8 = scmp.eq.s32.totalorder 0, 0
  // Predicated region
  $region6: #{gnnhf_conv.2} parent=0 // pred_check
    %p9 = pneg %p8
  $region7: #{gnnhf_conv.2} parent=0 // pred_check_branch
    %11 = sbr.rel (%p9) target = $region9
  $region8: #{gnnhf_conv.2} parent=0 // pred_region
    %vm12 = vcmask 7168
    %13 = vst.msk [vmem:[#allocation2] sm:$0xff] %vm12, 0.0
    %14 = vst.msk [vmem:[#allocation2 + $0x8] sm:$0xff] %vm12, 0.0
    %15 = vst.msk [vmem:[#allocation2 + $0x10] sm:$0xff] %vm12, 0.0
    %16 = vst.msk [vmem:[#allocation2 + $0x18] sm:$0xff] %vm12, 0.0
    %17 = vst.msk [vmem:[#allocation2 + $0x20] sm:$0xff] %vm12, 0.0
    %18 = vst.msk [vmem:[#allocation2 + $0x28] sm:$0xff] %vm12, 0.0
    %19 = vst.msk [vmem:[#allocation2 + $0x30] sm:$0xff] %vm12, 0.0
    %20 = vst.msk [vmem:[#allocation2 + $0x38] sm:$0xff] %vm12, 0.0
    %21 = vst.msk [vmem:[#allocation2 + $0x40] sm:$0xff] %vm12, 0.0
    %22 = vst.msk [vmem:[#allocation2 + $0x48] sm:$0xff] %vm12, 0.0
    %23 = vst.msk [vmem:[#allocation2 + $0x50] sm:$0xff] %vm12, 0.0
    %24 = vst.msk [vmem:[#allocation2 + $0x58] sm:$0xff] %vm12, 0.0
    %25 = vst.msk [vmem:[#allocation2 + $0x60] sm:$0xff] %vm12, 0.0
    %26 = vst.msk [vmem:[#allocation2 + $0x68] sm:$0xff] %vm12, 0.0
    %27 = vst.msk [vmem:[#allocation2 + $0x70] sm:$0xff] %vm12, 0.0
    %28 = vst.msk [vmem:[#allocation2 + $0x78] sm:$0xff] %vm12, 0.0
  $region9: #{gnnhf_conv.2} parent=0 // pred_fallthru
    _
  %v29 = vld [vmem:[#allocation2] sm:$0xff]
  %v30 = vld [vmem:[#allocation2 + $0x8] sm:$0xff]
  %v31 = vld [vmem:[#allocation2 + $0x10] sm:$0xff]
  %v32 = vld [vmem:[#allocation2 + $0x18] sm:$0xff]
  %v33 = vld [vmem:[#allocation2 + $0x20] sm:$0xff]
  %v34 = vld [vmem:[#allocation2 + $0x28] sm:$0xff]
  %v35 = vld [vmem:[#allocation2 + $0x30] sm:$0xff]
  %v36 = vld [vmem:[#allocation2 + $0x38] sm:$0xff]
  %v37 = vld [vmem:[#allocation2 + $0x40] sm:$0xff]
  %v38 = vld [vmem:[#allocation2 + $0x48] sm:$0xff]
  %v39 = vld [vmem:[#allocation2 + $0x50] sm:$0xff]
  %v40 = vld [vmem:[#allocation2 + $0x58] sm:$0xff]
  %v41 = vld [vmem:[#allocation2 + $0x60] sm:$0xff]
  %v42 = vld [vmem:[#allocation2 + $0x68] sm:$0xff]
  %v43 = vld [vmem:[#allocation2 + $0x70] sm:$0xff]
  %v44 = vld [vmem:[#allocation2 + $0x78] sm:$0xff]
  %v45 = vld [vmem:[%s0] sm:$0xff]
  %v46 = vld [vmem:[%s0 + $0x8] sm:$0xff]
  %v47 = vld [vmem:[%s0 + $0x10] sm:$0xff]
  %v48 = vld [vmem:[%s0 + $0x18] sm:$0xff]
  %v49 = vld [vmem:[%s0 + $0x20] sm:$0xff]
  %v50 = vld [vmem:[%s0 + $0x28] sm:$0xff]
  %v51 = vld [vmem:[%s0 + $0x30] sm:$0xff]
  %v52 = vld [vmem:[%s0 + $0x38] sm:$0xff]
  %v53 = vld [vmem:[%s0 + $0x40] sm:$0xff]
  %v54 = vld [vmem:[%s0 + $0x48] sm:$0xff]
  %v55 = vld [vmem:[%s0 + $0x50] sm:$0xff]
  %v56 = vld [vmem:[%s0 + $0x58] sm:$0xff]
  %v57 = vld [vmem:[%s0 + $0x60] sm:$0xff]
  %v58 = vld [vmem:[%s0 + $0x68] sm:$0xff]
  %v59 = vld [vmem:[%s0 + $0x70] sm:$0xff]
  %v60 = vld [vmem:[%s0 + $0x78] sm:$0xff]
  %61 = vadd.xlane.f32.xlu0 %v45
  %v62 = vpop.xlane.xlu0 %61
  %63 = vadd.xlane.f32.xlu0 %v46
  %v64 = vpop.xlane.xlu0 %63
  %65 = vadd.xlane.f32.xlu0 %v47
  %v66 = vpop.xlane.xlu0 %65
  %67 = vadd.xlane.f32.xlu0 %v48
  %v68 = vpop.xlane.xlu0 %67
  %69 = vadd.xlane.f32.xlu0 %v49
  %v70 = vpop.xlane.xlu0 %69
  %71 = vadd.xlane.f32.xlu0 %v50
  %v72 = vpop.xlane.xlu0 %71
  %73 = vadd.xlane.f32.xlu0 %v51
  %v74 = vpop.xlane.xlu0 %73
  %75 = vadd.xlane.f32.xlu0 %v52
  %v76 = vpop.xlane.xlu0 %75
  %77 = vadd.xlane.f32.xlu0 %v53
  %v78 = vpop.xlane.xlu0 %77
  %79 = vadd.xlane.f32.xlu0 %v54
  %v80 = vpop.xlane.xlu0 %79
  %81 = vadd.xlane.f32.xlu0 %v55
  %v82 = vpop.xlane.xlu0 %81
  %83 = vadd.xlane.f32.xlu0 %v56
  %v84 = vpop.xlane.xlu0 %83
  %85 = vadd.xlane.f32.xlu0 %v57
  %v86 = vpop.xlane.xlu0 %85
  %87 = vadd.xlane.f32.xlu0 %v58
  %v88 = vpop.xlane.xlu0 %87
  %89 = vadd.xlane.f32.xlu0 %v59
  %v90 = vpop.xlane.xlu0 %89
  %91 = vadd.xlane.f32.xlu0 %v60
  %v92 = vpop.xlane.xlu0 %91
  %v93 = vadd.f32 %v29, %v62
  %v94 = vadd.f32 %v30, %v64
  %v95 = vadd.f32 %v31, %v66
  %v96 = vadd.f32 %v32, %v68
  %v97 = vadd.f32 %v33, %v70
  %v98 = vadd.f32 %v34, %v72
  %v99 = vadd.f32 %v35, %v74
  %v100 = vadd.f32 %v36, %v76
  %v101 = vadd.f32 %v37, %v78
  %v102 = vadd.f32 %v38, %v80
  %v103 = vadd.f32 %v39, %v82
  %v104 = vadd.f32 %v40, %v84
  %v105 = vadd.f32 %v41, %v86
  %v106 = vadd.f32 %v42, %v88
  %v107 = vadd.f32 %v43, %v90
  %v108 = vadd.f32 %v44, %v92
  %vm109 = vcmask 7168
  %110 = vst.msk [vmem:[#allocation2] sm:$0xff] %vm109, %v93
  %111 = vst.msk [vmem:[#allocation2 + $0x8] sm:$0xff] %vm109, %v94
  %112 = vst.msk [vmem:[#allocation2 + $0x10] sm:$0xff] %vm109, %v95
  %113 = vst.msk [vmem:[#allocation2 + $0x18] sm:$0xff] %vm109, %v96
  %114 = vst.msk [vmem:[#allocation2 + $0x20] sm:$0xff] %vm109, %v97
  %115 = vst.msk [vmem:[#allocation2 + $0x28] sm:$0xff] %vm109, %v98
  %116 = vst.msk [vmem:[#allocation2 + $0x30] sm:$0xff] %vm109, %v99
  %117 = vst.msk [vmem:[#allocation2 + $0x38] sm:$0xff] %vm109, %v100
  %118 = vst.msk [vmem:[#allocation2 + $0x40] sm:$0xff] %vm109, %v101
  %119 = vst.msk [vmem:[#allocation2 + $0x48] sm:$0xff] %vm109, %v102
  %120 = vst.msk [vmem:[#allocation2 + $0x50] sm:$0xff] %vm109, %v103
  %121 = vst.msk [vmem:[#allocation2 + $0x58] sm:$0xff] %vm109, %v104
  %122 = vst.msk [vmem:[#allocation2 + $0x60] sm:$0xff] %vm109, %v105
  %123 = vst.msk [vmem:[#allocation2 + $0x68] sm:$0xff] %vm109, %v106
  %124 = vst.msk [vmem:[#allocation2 + $0x70] sm:$0xff] %vm109, %v107
  %125 = vst.msk [vmem:[#allocation2 + $0x78] sm:$0xff] %vm109, %v108
  // Predicated region
  $region10: #{gnnhf_conv.2} parent=0 // pred_check
    %p126 = pneg %p8
  $region11: #{gnnhf_conv.2} parent=0 // pred_check_branch
    %128 = sbr.rel (%p126) target = $region13
  $region12: #{gnnhf_conv.2} parent=0 // pred_region
    %v129 = vld [vmem:[#allocation2] sm:$0xff]
    %v130 = vld [vmem:[#allocation2 + $0x8] sm:$0xff]
    %v131 = vld [vmem:[#allocation2 + $0x10] sm:$0xff]
    %v132 = vld [vmem:[#allocation2 + $0x18] sm:$0xff]
    %v133 = vld [vmem:[#allocation2 + $0x20] sm:$0xff]
    %v134 = vld [vmem:[#allocation2 + $0x28] sm:$0xff]
    %v135 = vld [vmem:[#allocation2 + $0x30] sm:$0xff]
    %v136 = vld [vmem:[#allocation2 + $0x38] sm:$0xff]
    %v137 = vld [vmem:[#allocation2 + $0x40] sm:$0xff]
    %v138 = vld [vmem:[#allocation2 + $0x48] sm:$0xff]
    %v139 = vld [vmem:[#allocation2 + $0x50] sm:$0xff]
    %v140 = vld [vmem:[#allocation2 + $0x58] sm:$0xff]
    %v141 = vld [vmem:[#allocation2 + $0x60] sm:$0xff]
    %v142 = vld [vmem:[#allocation2 + $0x68] sm:$0xff]
    %v143 = vld [vmem:[#allocation2 + $0x70] sm:$0xff]
    %v144 = vld [vmem:[#allocation2 + $0x78] sm:$0xff]
    %v145 = vmax.f32 %v129, 1.0
    %v146 = vmax.f32 %v130, 1.0
    %v147 = vmax.f32 %v131, 1.0
    %v148 = vmax.f32 %v132, 1.0
    %v149 = vmax.f32 %v133, 1.0
    %v150 = vmax.f32 %v134, 1.0
    %v151 = vmax.f32 %v135, 1.0
    %v152 = vmax.f32 %v136, 1.0
    %v153 = vmax.f32 %v137, 1.0
    %v154 = vmax.f32 %v138, 1.0
    %v155 = vmax.f32 %v139, 1.0
    %v156 = vmax.f32 %v140, 1.0
    %v157 = vmax.f32 %v141, 1.0
    %v158 = vmax.f32 %v142, 1.0
    %v159 = vmax.f32 %v143, 1.0
    %v160 = vmax.f32 %v144, 1.0
    %v161 = vrsqrt.pop %v145
    %v162 = vmul.f32 %v161, %v145
    %v163 = vmul.f32 %v162, %v161
    %v164 = vmul.f32 0.5, %v163
    %v165 = vsub.f32 1.5, %v164
    %v166 = vmul.f32 %v161, %v165
    %vm167 = vweird.f32 %v145
    %vm168 = vweird.f32 %v161
    %vm169 = vmor %vm167, %vm168
    %v170 = vsel %vm169, %v161, %v166
    %v171 = vrsqrt.pop %v146
    %v172 = vmul.f32 %v171, %v146
    %v173 = vmul.f32 %v172, %v171
    %v174 = vmul.f32 0.5, %v173
    %v175 = vsub.f32 1.5, %v174
    %v176 = vmul.f32 %v171, %v175
    %vm177 = vweird.f32 %v146
    %vm178 = vweird.f32 %v171
    %vm179 = vmor %vm177, %vm178
    %v180 = vsel %vm179, %v171, %v176
    %v181 = vrsqrt.pop %v147
    %v182 = vmul.f32 %v181, %v147
    %v183 = vmul.f32 %v182, %v181
    %v184 = vmul.f32 0.5, %v183
    %v185 = vsub.f32 1.5, %v184
    %v186 = vmul.f32 %v181, %v185
    %vm187 = vweird.f32 %v147
    %vm188 = vweird.f32 %v181
    %vm189 = vmor %vm187, %vm188
    %v190 = vsel %vm189, %v181, %v186
    %v191 = vrsqrt.pop %v148
    %v192 = vmul.f32 %v191, %v148
    %v193 = vmul.f32 %v192, %v191
    %v194 = vmul.f32 0.5, %v193
    %v195 = vsub.f32 1.5, %v194
    %v196 = vmul.f32 %v191, %v195
    %vm197 = vweird.f32 %v148
    %vm198 = vweird.f32 %v191
    %vm199 = vmor %vm197, %vm198
    %v200 = vsel %vm199, %v191, %v196
    %v201 = vrsqrt.pop %v149
    %v202 = vmul.f32 %v201, %v149
    %v203 = vmul.f32 %v202, %v201
    %v204 = vmul.f32 0.5, %v203
    %v205 = vsub.f32 1.5, %v204
    %v206 = vmul.f32 %v201, %v205
    %vm207 = vweird.f32 %v149
    %vm208 = vweird.f32 %v201
    %vm209 = vmor %vm207, %vm208
    %v210 = vsel %vm209, %v201, %v206
    %v211 = vrsqrt.pop %v150
    %v212 = vmul.f32 %v211, %v150
    %v213 = vmul.f32 %v212, %v211
    %v214 = vmul.f32 0.5, %v213
    %v215 = vsub.f32 1.5, %v214
    %v216 = vmul.f32 %v211, %v215
    %vm217 = vweird.f32 %v150
    %vm218 = vweird.f32 %v211
    %vm219 = vmor %vm217, %vm218
    %v220 = vsel %vm219, %v211, %v216
    %v221 = vrsqrt.pop %v151
    %v222 = vmul.f32 %v221, %v151
    %v223 = vmul.f32 %v222, %v221
    %v224 = vmul.f32 0.5, %v223
    %v225 = vsub.f32 1.5, %v224
    %v226 = vmul.f32 %v221, %v225
    %vm227 = vweird.f32 %v151
    %vm228 = vweird.f32 %v221
    %vm229 = vmor %vm227, %vm228
    %v230 = vsel %vm229, %v221, %v226
    %v231 = vrsqrt.pop %v152
    %v232 = vmul.f32 %v231, %v152
    %v233 = vmul.f32 %v232, %v231
    %v234 = vmul.f32 0.5, %v233
    %v235 = vsub.f32 1.5, %v234
    %v236 = vmul.f32 %v231, %v235
    %vm237 = vweird.f32 %v152
    %vm238 = vweird.f32 %v231
    %vm239 = vmor %vm237, %vm238
    %v240 = vsel %vm239, %v231, %v236
    %v241 = vrsqrt.pop %v153
    %v242 = vmul.f32 %v241, %v153
    %v243 = vmul.f32 %v242, %v241
    %v244 = vmul.f32 0.5, %v243
    %v245 = vsub.f32 1.5, %v244
    %v246 = vmul.f32 %v241, %v245
    %vm247 = vweird.f32 %v153
    %vm248 = vweird.f32 %v241
    %vm249 = vmor %vm247, %vm248
    %v250 = vsel %vm249, %v241, %v246
    %v251 = vrsqrt.pop %v154
    %v252 = vmul.f32 %v251, %v154
    %v253 = vmul.f32 %v252, %v251
    %v254 = vmul.f32 0.5, %v253
    %v255 = vsub.f32 1.5, %v254
    %v256 = vmul.f32 %v251, %v255
    %vm257 = vweird.f32 %v154
    %vm258 = vweird.f32 %v251
    %vm259 = vmor %vm257, %vm258
    %v260 = vsel %vm259, %v251, %v256
    %v261 = vrsqrt.pop %v155
    %v262 = vmul.f32 %v261, %v155
    %v263 = vmul.f32 %v262, %v261
    %v264 = vmul.f32 0.5, %v263
    %v265 = vsub.f32 1.5, %v264
    %v266 = vmul.f32 %v261, %v265
    %vm267 = vweird.f32 %v155
    %vm268 = vweird.f32 %v261
    %vm269 = vmor %vm267, %vm268
    %v270 = vsel %vm269, %v261, %v266
    %v271 = vrsqrt.pop %v156
    %v272 = vmul.f32 %v271, %v156
    %v273 = vmul.f32 %v272, %v271
    %v274 = vmul.f32 0.5, %v273
    %v275 = vsub.f32 1.5, %v274
    %v276 = vmul.f32 %v271, %v275
    %vm277 = vweird.f32 %v156
    %vm278 = vweird.f32 %v271
    %vm279 = vmor %vm277, %vm278
    %v280 = vsel %vm279, %v271, %v276
    %v281 = vrsqrt.pop %v157
    %v282 = vmul.f32 %v281, %v157
    %v283 = vmul.f32 %v282, %v281
    %v284 = vmul.f32 0.5, %v283
    %v285 = vsub.f32 1.5, %v284
    %v286 = vmul.f32 %v281, %v285
    %vm287 = vweird.f32 %v157
    %vm288 = vweird.f32 %v281
    %vm289 = vmor %vm287, %vm288
    %v290 = vsel %vm289, %v281, %v286
    %v291 = vrsqrt.pop %v158
    %v292 = vmul.f32 %v291, %v158
    %v293 = vmul.f32 %v292, %v291
    %v294 = vmul.f32 0.5, %v293
    %v295 = vsub.f32 1.5, %v294
    %v296 = vmul.f32 %v291, %v295
    %vm297 = vweird.f32 %v158
    %vm298 = vweird.f32 %v291
    %vm299 = vmor %vm297, %vm298
    %v300 = vsel %vm299, %v291, %v296
    %v301 = vrsqrt.pop %v159
    %v302 = vmul.f32 %v301, %v159
    %v303 = vmul.f32 %v302, %v301
    %v304 = vmul.f32 0.5, %v303
    %v305 = vsub.f32 1.5, %v304
    %v306 = vmul.f32 %v301, %v305
    %vm307 = vweird.f32 %v159
    %vm308 = vweird.f32 %v301
    %vm309 = vmor %vm307, %vm308
    %v310 = vsel %vm309, %v301, %v306
    %v311 = vrsqrt.pop %v160
    %v312 = vmul.f32 %v311, %v160
    %v313 = vmul.f32 %v312, %v311
    %v314 = vmul.f32 0.5, %v313
    %v315 = vsub.f32 1.5, %v314
    %v316 = vmul.f32 %v311, %v315
    %vm317 = vweird.f32 %v160
    %vm318 = vweird.f32 %v311
    %vm319 = vmor %vm317, %vm318
    %v320 = vsel %vm319, %v311, %v316
    %321 = vst.msk [vmem:[%s1] sm:$0xff] %vm109, %v170
    %322 = vst.msk [vmem:[%s1 + $0x8] sm:$0xff] %vm109, %v180
    %323 = vst.msk [vmem:[%s1 + $0x10] sm:$0xff] %vm109, %v190
    %324 = vst.msk [vmem:[%s1 + $0x18] sm:$0xff] %vm109, %v200
    %325 = vst.msk [vmem:[%s1 + $0x20] sm:$0xff] %vm109, %v210
    %326 = vst.msk [vmem:[%s1 + $0x28] sm:$0xff] %vm109, %v220
    %327 = vst.msk [vmem:[%s1 + $0x30] sm:$0xff] %vm109, %v230
    %328 = vst.msk [vmem:[%s1 + $0x38] sm:$0xff] %vm109, %v240
    %329 = vst.msk [vmem:[%s1 + $0x40] sm:$0xff] %vm109, %v250
    %330 = vst.msk [vmem:[%s1 + $0x48] sm:$0xff] %vm109, %v260
    %331 = vst.msk [vmem:[%s1 + $0x50] sm:$0xff] %vm109, %v270
    %332 = vst.msk [vmem:[%s1 + $0x58] sm:$0xff] %vm109, %v280
    %333 = vst.msk [vmem:[%s1 + $0x60] sm:$0xff] %vm109, %v290
    %334 = vst.msk [vmem:[%s1 + $0x68] sm:$0xff] %vm109, %v300
    %335 = vst.msk [vmem:[%s1 + $0x70] sm:$0xff] %vm109, %v310
    %336 = vst.msk [vmem:[%s1 + $0x78] sm:$0xff] %vm109, %v320
  $region13: #{gnnhf_conv.2} parent=0 // pred_fallthru
    _
  // Predicated region
  $region14: #{gnnhf_conv.2} parent=0 // pred_check
    _
  $region15: #{gnnhf_conv.2} parent=0 // pred_check_branch
    %338 = sbr.rel (0) target = $region17
  $region16: #{gnnhf_conv.2} parent=0 // pred_region
    _
  $region17: #{gnnhf_conv.2} parent=0 // pred_fallthru
    _
  // Predicated region
  $region18: #{gnnhf_conv.2} parent=0 // pred_check
    _
  $region19: #{gnnhf_conv.2} parent=0 // pred_check_branch
    %340 = sbr.rel (0) target = $region21
  $region20: #{gnnhf_conv.2} parent=0 // pred_region
    _
  $region21: #{gnnhf_conv.2} parent=0 // pred_fallthru
    _

// kernel: custom-call.10
$region0: #{custom-call.10}
  %s0 = inlined_call_operand.vmem [shape: f32[1,16,16], index: 0, kind: input, shape index: {}]
  %s1 = inlined_call_operand.vmem [shape: f32[1,16,16], index: 1, kind: output, shape index: {}]
  $region1: #{custom-call.10} parent=0
    #allocation0 [shape = 'u8[8192]{0}', space=vmem, size = 0x2000, scoped, tag = 'operand span for operand 0']
    #allocation1 [shape = 'u8[8192]{0}', space=vmem, size = 0x2000, scoped, tag = 'operand span for operand 1']
    #allocation2 [shape = 'f32[16,16]{1,0}', space=vmem, size = 0x2000, scoped, tag = 'rescaled input a']
    // Predicated region
    $region2: #{custom-call.10} parent=1 // pred_check
      _
    $region3: #{custom-call.10} parent=1 // pred_check_branch
      %3 = sbr.rel (0) target = $region5
    $region4: #{custom-call.10} parent=1 // pred_region
      // Predicated region
      $region6: #{custom-call.10} parent=4 // pred_check
        _
      $region7: #{custom-call.10} parent=4 // pred_check_branch
        %5 = sbr.rel (0) target = $region9
      $region8: #{custom-call.10} parent=4 // pred_region
        // Predicated region
        $region21: #{custom-call.10} parent=8 // pred_check
          _
        $region22: #{custom-call.10} parent=8 // pred_check_branch
          %23 = sbr.rel (0) target = $region24
        $region23: #{custom-call.10} parent=8 // pred_region
          loop: start=0, step=1, limit=1
          $region25: #{custom-call.10} parent=23 // loop_pre_header
            _
          $region26: #{custom-call.10} parent=23 // loop_header
            %s25 = sphi 0, %s29
            %p26 = scmp.ge.s32.totalorder %s25, 1
            %s30 = sphi %s0, %s0
            %s31 = sphi [#allocation0], [#allocation0]
          $region27: #{custom-call.10} parent=23 // loop_header_branch
            %28 = sbr.rel (%p26) target = $region31
          $region28: #{custom-call.10} parent=23 // loop_body
            %v32 = vld [vmem:[%s30] sm:$0xff]
            %33 = vst [vmem:[%s31] sm:$0xff] %v32
            %v34 = vld [vmem:[%s30 + $0x8] sm:$0xff]
            %35 = vst [vmem:[%s31 + $0x8] sm:$0xff] %v34
          $region29: #{custom-call.10} parent=23 // loop_footer
            %s29 = sadd.s32 1, %s25
          $region30: #{custom-call.10} parent=23 // loop_footer_branch
            %24 = sbr.rel target = $region26
          $region31: #{custom-call.10} parent=23 // loop_exit
            _
        $region24: #{custom-call.10} parent=8 // pred_fallthru
          _
        // Predicated region
        $region32: #{custom-call.10} parent=8 // pred_check
          _
        $region33: #{custom-call.10} parent=8 // pred_check_branch
          %37 = sbr.rel target = $region35
        $region34: #{custom-call.10} parent=8 // pred_region
          _
        $region35: #{custom-call.10} parent=8 // pred_fallthru
          _
      $region9: #{custom-call.10} parent=4 // pred_fallthru
        _
      // Predicated region
      $region10: #{custom-call.10} parent=4 // pred_check
        _
      $region11: #{custom-call.10} parent=4 // pred_check_branch
        %7 = sbr.rel target = $region13
      $region12: #{custom-call.10} parent=4 // pred_region
        %s9 = ssub.s32 256, 1
        loop: start=0, step=1, limit=1
        $region14: #{custom-call.10} parent=12 // loop_pre_header
          _
        $region15: #{custom-call.10} parent=12 // loop_header
          %s11 = sphi 0, %s15
          %p12 = scmp.ge.s32.totalorder %s11, 1
          %s16 = sphi %s0, %s0
          %s17 = sphi [#allocation0], [#allocation0]
        $region16: #{custom-call.10} parent=12 // loop_header_branch
          %14 = sbr.rel (%p12) target = $region20
        $region17: #{custom-call.10} parent=12 // loop_body
          %v18 = vld [vmem:[%s16] sm:%s9]
          %19 = vst [vmem:[%s17] sm:%s9] %v18
          %v20 = vld [vmem:[%s16 + $0x8] sm:%s9]
          %21 = vst [vmem:[%s17 + $0x8] sm:%s9] %v20
        $region18: #{custom-call.10} parent=12 // loop_footer
          %s15 = sadd.s32 1, %s11
        $region19: #{custom-call.10} parent=12 // loop_footer_branch
          %10 = sbr.rel target = $region15
        $region20: #{custom-call.10} parent=12 // loop_exit
          _
      $region13: #{custom-call.10} parent=4 // pred_fallthru
        _
    $region5: #{custom-call.10} parent=1 // pred_fallthru
      _
    %38 = vnop
    %v39 = vlaneseq
    %v40 = vand.u32 %v39, 127
    %vm41 = vcmp.lt.s32.totalorder %v40, 16
    %v42 = vlaneseq
    %v43 = vshrl.u32 %v42, 7
    %vm45 = vcmp.eq.s32.totalorder %v43, %v40
    %v46 = vld [vmem:[#allocation0] sm:$0xff]
    %v47 = vsel %vm45, %v46, 0.0
    %48 = vadd.xlane.f32.xlu0 %v47
    %v49 = vpop.xlane.xlu0 %48
    %vm50 = vcmp.ge.s32.totalorder %v43, %v40
    %vm51 = vmand %vm50, %vm41
    %v52 = vsel %vm51, %v46, 0.0
    %v53 = vrcp.pop %v49
    %v54 = vmul.f32 %v49, %v53
    %v55 = vsub.f32 1.0, %v54
    %v56 = vmul.f32 %v53, %v55
    %v57 = vadd.f32 %v53, %v56
    %vm58 = vweird.f32 %v49
    %vm59 = vweird.f32 %v53
    %vm60 = vmor %vm58, %vm59
    %v61 = vsel %vm60, %v53, %v57
    %v62 = vand.u32 2147483647, %v49
    %vm63 = vcmp.eq.f32.partialorder %v62, 8.507059e+37
    %v64 = vand.u32 %v49, 2147483648
    %v65 = vor.u32 1.1754944e-38, %v64
    %v66 = vsel %vm63, %v65, %v61
    %v67 = vmul.f32 %v52, %v66
    %68 = vst [vmem:[#allocation2] sm:$0xff] %v67
    %s69 = scalar_lea.vmem [#allocation0], 8
    %s70 = scalar_lea.vmem [#allocation2], 8
    %v71 = vlaneseq
    %v72 = vshrl.u32 %v71, 7
    %v73 = vadd.s32 %v72, 8
    %vm74 = vcmp.eq.s32.totalorder %v73, %v40
    %v75 = vld [vmem:[%s69] sm:$0xff]
    %v76 = vsel %vm74, %v75, 0.0
    %77 = vadd.xlane.f32.xlu0 %v76
    %v78 = vpop.xlane.xlu0 %77
    %vm79 = vcmp.ge.s32.totalorder %v73, %v40
    %vm80 = vmand %vm79, %vm41
    %v81 = vsel %vm80, %v75, 0.0
    %v82 = vrcp.pop %v78
    %v83 = vmul.f32 %v78, %v82
    %v84 = vsub.f32 1.0, %v83
    %v85 = vmul.f32 %v82, %v84
    %v86 = vadd.f32 %v82, %v85
    %vm87 = vweird.f32 %v78
    %vm88 = vweird.f32 %v82
    %vm89 = vmor %vm87, %vm88
    %v90 = vsel %vm89, %v82, %v86
    %v91 = vand.u32 2147483647, %v78
    %vm92 = vcmp.eq.f32.partialorder %v91, 8.507059e+37
    %v93 = vand.u32 %v78, 2147483648
    %v94 = vor.u32 1.1754944e-38, %v93
    %v95 = vsel %vm92, %v94, %v90
    %v96 = vmul.f32 %v81, %v95
    %97 = vst [vmem:[%s70] sm:$0xff] %v96
    %v98 = vlaneseq
    %v99 = vand.u32 %v98, 127
    %v100 = vlaneseq
    %v101 = vshrl.u32 %v100, 7
    %vm103 = vcmp.eq.s32.totalorder %v99, %v101
    %v104 = vlaneseq
    %v105 = vand.u32 %v104, 127
    %vm106 = vcmp.eq.s32.totalorder %v105, 0
    %v107 = vsel %vm106, 1.0, -1.0
    %v108 = vsel %vm103, %v107, 0.0
    %v109 = vlaneseq
    %v110 = vand.u32 %v109, 127
    %v111 = vlaneseq
    %v112 = vshrl.u32 %v111, 7
    %v113 = vadd.s32 %v112, 8
    %vm114 = vcmp.eq.s32.totalorder %v110, %v113
    %v115 = vsel %vm114, -1.0, 0.0
    %s116 = scalar_lea.vmem [#allocation2], 1
    %v117 = vld [vmem:[%s116] ss:$0 sm:$0xff]
    %v118 = vxor.u32 %v117, 2147483648
    %v119 = vlaneseq
    %v120 = vand.u32 %v119, 127
    %vm121 = vcmp.eq.s32.totalorder %v120, 1
    %v122 = vmul.f32 %v118, %v108
    %123 = vadd.xlane.f32.xlu0 %v122
    %v124 = vpop.xlane.xlu0 %123
    %v125 = vsel %vm121, %v124, %v108
    %s126 = scalar_lea.vmem [#allocation2], 2
    %v127 = vld [vmem:[%s126] ss:$0 sm:$0xff]
    %v128 = vxor.u32 %v127, 2147483648
    %v129 = vlaneseq
    %v130 = vand.u32 %v129, 127
    %vm131 = vcmp.eq.s32.totalorder %v130, 2
    %v132 = vmul.f32 %v128, %v125
    %133 = vadd.xlane.f32.xlu0 %v132
    %v134 = vpop.xlane.xlu0 %133
    %v135 = vsel %vm131, %v134, %v125
    %s136 = scalar_lea.vmem [#allocation2], 3
    %v137 = vld [vmem:[%s136] ss:$0 sm:$0xff]
    %v138 = vxor.u32 %v137, 2147483648
    %v139 = vlaneseq
    %v140 = vand.u32 %v139, 127
    %vm141 = vcmp.eq.s32.totalorder %v140, 3
    %v142 = vmul.f32 %v138, %v135
    %143 = vadd.xlane.f32.xlu0 %v142
    %v144 = vpop.xlane.xlu0 %143
    %v145 = vsel %vm141, %v144, %v135
    %s146 = scalar_lea.vmem [#allocation2], 4
    %v147 = vld [vmem:[%s146] ss:$0 sm:$0xff]
    %v148 = vxor.u32 %v147, 2147483648
    %v149 = vlaneseq
    %v150 = vand.u32 %v149, 127
    %vm151 = vcmp.eq.s32.totalorder %v150, 4
    %v152 = vmul.f32 %v148, %v145
    %153 = vadd.xlane.f32.xlu0 %v152
    %v154 = vpop.xlane.xlu0 %153
    %v155 = vsel %vm151, %v154, %v145
    %s156 = scalar_lea.vmem [#allocation2], 5
    %v157 = vld [vmem:[%s156] ss:$0 sm:$0xff]
    %v158 = vxor.u32 %v157, 2147483648
    %v159 = vlaneseq
    %v160 = vand.u32 %v159, 127
    %vm161 = vcmp.eq.s32.totalorder %v160, 5
    %v162 = vmul.f32 %v158, %v155
    %163 = vadd.xlane.f32.xlu0 %v162
    %v164 = vpop.xlane.xlu0 %163
    %v165 = vsel %vm161, %v164, %v155
    %s166 = scalar_lea.vmem [#allocation2], 6
    %v167 = vld [vmem:[%s166] ss:$0 sm:$0xff]
    %v168 = vxor.u32 %v167, 2147483648
    %v169 = vlaneseq
    %v170 = vand.u32 %v169, 127
    %vm171 = vcmp.eq.s32.totalorder %v170, 6
    %v172 = vmul.f32 %v168, %v165
    %173 = vadd.xlane.f32.xlu0 %v172
    %v174 = vpop.xlane.xlu0 %173
    %v175 = vsel %vm171, %v174, %v165
    %s176 = scalar_lea.vmem [#allocation2], 7
    %v177 = vld [vmem:[%s176] ss:$0 sm:$0xff]
    %v178 = vxor.u32 %v177, 2147483648
    %v179 = vlaneseq
    %v180 = vand.u32 %v179, 127
    %vm181 = vcmp.eq.s32.totalorder %v180, 7
    %v182 = vmul.f32 %v178, %v175
    %183 = vadd.xlane.f32.xlu0 %v182
    %v184 = vpop.xlane.xlu0 %183
    %v185 = vsel %vm181, %v184, %v175
    %s186 = scalar_lea.vmem [#allocation2], 8
    %v187 = vld [vmem:[%s186] ss:$0 sm:$0xff]
    %v188 = vxor.u32 %v187, 2147483648
    %v189 = vlaneseq
    %v190 = vand.u32 %v189, 127
    %vm191 = vcmp.eq.s32.totalorder %v190, 8
    %v192 = vmul.f32 %v188, %v185
    %193 = vadd.xlane.f32.xlu0 %v192
    %v194 = vpop.xlane.xlu0 %193
    %v195 = vsel %vm191, %v194, %v185
    %v196 = vmul.f32 %v188, %v115
    %197 = vadd.xlane.f32.xlu0 %v196
    %v198 = vpop.xlane.xlu0 %197
    %v199 = vsel %vm191, %v198, %v115
    %s200 = scalar_lea.vmem [#allocation2], 9
    %v201 = vld [vmem:[%s200] ss:$0 sm:$0xff]
    %v202 = vxor.u32 %v201, 2147483648
    %v203 = vlaneseq
    %v204 = vand.u32 %v203, 127
    %vm205 = vcmp.eq.s32.totalorder %v204, 9
    %v206 = vmul.f32 %v202, %v195
    %207 = vadd.xlane.f32.xlu0 %v206
    %v208 = vpop.xlane.xlu0 %207
    %v209 = vsel %vm205, %v208, %v195
    %v210 = vmul.f32 %v202, %v199
    %211 = vadd.xlane.f32.xlu0 %v210
    %v212 = vpop.xlane.xlu0 %211
    %v213 = vsel %vm205, %v212, %v199
    %s214 = scalar_lea.vmem [#allocation2], 10
    %v215 = vld [vmem:[%s214] ss:$0 sm:$0xff]
    %v216 = vxor.u32 %v215, 2147483648
    %v217 = vlaneseq
    %v218 = vand.u32 %v217, 127
    %vm219 = vcmp.eq.s32.totalorder %v218, 10
    %v220 = vmul.f32 %v216, %v209
    %221 = vadd.xlane.f32.xlu0 %v220
    %v222 = vpop.xlane.xlu0 %221
    %v223 = vsel %vm219, %v222, %v209
    %v224 = vmul.f32 %v216, %v213
    %225 = vadd.xlane.f32.xlu0 %v224
    %v226 = vpop.xlane.xlu0 %225
    %v227 = vsel %vm219, %v226, %v213
    %s228 = scalar_lea.vmem [#allocation2], 11
    %v229 = vld [vmem:[%s228] ss:$0 sm:$0xff]
    %v230 = vxor.u32 %v229, 2147483648
    %v231 = vlaneseq
    %v232 = vand.u32 %v231, 127
    %vm233 = vcmp.eq.s32.totalorder %v232, 11
    %v234 = vmul.f32 %v230, %v223
    %235 = vadd.xlane.f32.xlu0 %v234
    %v236 = vpop.xlane.xlu0 %235
    %v237 = vsel %vm233, %v236, %v223
    %v238 = vmul.f32 %v230, %v227
    %239 = vadd.xlane.f32.xlu0 %v238
    %v240 = vpop.xlane.xlu0 %239
    %v241 = vsel %vm233, %v240, %v227
    %s242 = scalar_lea.vmem [#allocation2], 12
    %v243 = vld [vmem:[%s242] ss:$0 sm:$0xff]
    %v244 = vxor.u32 %v243, 2147483648
    %v245 = vlaneseq
    %v246 = vand.u32 %v245, 127
    %vm247 = vcmp.eq.s32.totalorder %v246, 12
    %v248 = vmul.f32 %v244, %v237
    %249 = vadd.xlane.f32.xlu0 %v248
    %v250 = vpop.xlane.xlu0 %249
    %v251 = vsel %vm247, %v250, %v237
    %v252 = vmul.f32 %v244, %v241
    %253 = vadd.xlane.f32.xlu0 %v252
    %v254 = vpop.xlane.xlu0 %253
    %v255 = vsel %vm247, %v254, %v241
    %s256 = scalar_lea.vmem [#allocation2], 13
    %v257 = vld [vmem:[%s256] ss:$0 sm:$0xff]
    %v258 = vxor.u32 %v257, 2147483648
    %v259 = vlaneseq
    %v260 = vand.u32 %v259, 127
    %vm261 = vcmp.eq.s32.totalorder %v260, 13
    %v262 = vmul.f32 %v258, %v251
    %263 = vadd.xlane.f32.xlu0 %v262
    %v264 = vpop.xlane.xlu0 %263
    %v265 = vsel %vm261, %v264, %v251
    %v266 = vmul.f32 %v258, %v255
    %267 = vadd.xlane.f32.xlu0 %v266
    %v268 = vpop.xlane.xlu0 %267
    %v269 = vsel %vm261, %v268, %v255
    %s270 = scalar_lea.vmem [#allocation2], 14
    %v271 = vld [vmem:[%s270] ss:$0 sm:$0xff]
    %v272 = vxor.u32 %v271, 2147483648
    %v273 = vlaneseq
    %v274 = vand.u32 %v273, 127
    %vm275 = vcmp.eq.s32.totalorder %v274, 14
    %v276 = vmul.f32 %v272, %v265
    %277 = vadd.xlane.f32.xlu0 %v276
    %v278 = vpop.xlane.xlu0 %277
    %v279 = vsel %vm275, %v278, %v265
    %v280 = vmul.f32 %v272, %v269
    %281 = vadd.xlane.f32.xlu0 %v280
    %v282 = vpop.xlane.xlu0 %281
    %v283 = vsel %vm275, %v282, %v269
    %s284 = scalar_lea.vmem [#allocation2], 15
    %v285 = vld [vmem:[%s284] ss:$0 sm:$0xff]
    %v286 = vxor.u32 %v285, 2147483648
    %v287 = vlaneseq
    %v288 = vand.u32 %v287, 127
    %vm289 = vcmp.eq.s32.totalorder %v288, 15
    %v290 = vmul.f32 %v286, %v279
    %291 = vadd.xlane.f32.xlu0 %v290
    %v292 = vpop.xlane.xlu0 %291
    %v293 = vsel %vm289, %v292, %v279
    %v294 = vmul.f32 %v286, %v283
    %295 = vadd.xlane.f32.xlu0 %v294
    %v296 = vpop.xlane.xlu0 %295
    %v297 = vsel %vm289, %v296, %v283
    %v298 = vrcp.pop %v49
    %v299 = vmul.f32 %v49, %v298
    %v300 = vsub.f32 1.0, %v299
    %v301 = vmul.f32 %v298, %v300
    %v302 = vadd.f32 %v298, %v301
    %vm303 = vweird.f32 %v49
    %vm304 = vweird.f32 %v298
    %vm305 = vmor %vm303, %vm304
    %v306 = vsel %vm305, %v298, %v302
    %v307 = vand.u32 2147483647, %v49
    %vm308 = vcmp.eq.f32.partialorder %v307, 8.507059e+37
    %v309 = vand.u32 %v49, 2147483648
    %v310 = vor.u32 1.1754944e-38, %v309
    %v311 = vsel %vm308, %v310, %v306
    %v312 = vmul.f32 %v293, %v311
    %vm313 = vweird.f32 %v49
    %v314 = vsel %vm313, %v293, %v312
    %315 = vst [vmem:[#allocation1] sm:$0xff] %v314
    %v316 = vrcp.pop %v78
    %v317 = vmul.f32 %v78, %v316
    %v318 = vsub.f32 1.0, %v317
    %v319 = vmul.f32 %v316, %v318
    %v320 = vadd.f32 %v316, %v319
    %vm321 = vweird.f32 %v78
    %vm322 = vweird.f32 %v316
    %vm323 = vmor %vm321, %vm322
    %v324 = vsel %vm323, %v316, %v320
    %v325 = vand.u32 2147483647, %v78
    %vm326 = vcmp.eq.f32.partialorder %v325, 8.507059e+37
    %v327 = vand.u32 %v78, 2147483648
    %v328 = vor.u32 1.1754944e-38, %v327
    %v329 = vsel %vm326, %v328, %v324
    %v330 = vmul.f32 %v297, %v329
    %vm331 = vweird.f32 %v78
    %v332 = vsel %vm331, %v297, %v330
    %s333 = scalar_lea.vmem [#allocation1], 8
    %334 = vst [vmem:[%s333] sm:$0xff] %v332
    // Predicated region
    $region36: #{custom-call.10} parent=1 // pred_check
      _
    $region37: #{custom-call.10} parent=1 // pred_check_branch
      %336 = sbr.rel (0) target = $region39
    $region38: #{custom-call.10} parent=1 // pred_region
      // Predicated region
      $region40: #{custom-call.10} parent=38 // pred_check
        _
      $region41: #{custom-call.10} parent=38 // pred_check_branch
        %338 = sbr.rel (0) target = $region43
      $region42: #{custom-call.10} parent=38 // pred_region
        // Predicated region
        $region55: #{custom-call.10} parent=42 // pred_check
          _
        $region56: #{custom-call.10} parent=42 // pred_check_branch
          %356 = sbr.rel (0) target = $region58
        $region57: #{custom-call.10} parent=42 // pred_region
          loop: start=0, step=1, limit=1
          $region59: #{custom-call.10} parent=57 // loop_pre_header
            _
          $region60: #{custom-call.10} parent=57 // loop_header
            %s358 = sphi 0, %s362
            %p359 = scmp.ge.s32.totalorder %s358, 1
            %s363 = sphi [#allocation1], [#allocation1]
            %s364 = sphi %s1, %s1
          $region61: #{custom-call.10} parent=57 // loop_header_branch
            %361 = sbr.rel (%p359) target = $region65
          $region62: #{custom-call.10} parent=57 // loop_body
            %v365 = vld [vmem:[%s363] sm:$0xff]
            %366 = vst [vmem:[%s364] sm:$0xff] %v365
            %v367 = vld [vmem:[%s363 + $0x8] sm:$0xff]
            %368 = vst [vmem:[%s364 + $0x8] sm:$0xff] %v367
          $region63: #{custom-call.10} parent=57 // loop_footer
            %s362 = sadd.s32 1, %s358
          $region64: #{custom-call.10} parent=57 // loop_footer_branch
            %357 = sbr.rel target = $region60
          $region65: #{custom-call.10} parent=57 // loop_exit
            _
        $region58: #{custom-call.10} parent=42 // pred_fallthru
          _
        // Predicated region
        $region66: #{custom-call.10} parent=42 // pred_check
          _
        $region67: #{custom-call.10} parent=42 // pred_check_branch
          %370 = sbr.rel target = $region69
        $region68: #{custom-call.10} parent=42 // pred_region
          _
        $region69: #{custom-call.10} parent=42 // pred_fallthru
          _
      $region43: #{custom-call.10} parent=38 // pred_fallthru
        _
      // Predicated region
      $region44: #{custom-call.10} parent=38 // pred_check
        _
      $region45: #{custom-call.10} parent=38 // pred_check_branch
        %340 = sbr.rel target = $region47
      $region46: #{custom-call.10} parent=38 // pred_region
        %s342 = ssub.s32 256, 1
        loop: start=0, step=1, limit=1
        $region48: #{custom-call.10} parent=46 // loop_pre_header
          _
        $region49: #{custom-call.10} parent=46 // loop_header
          %s344 = sphi 0, %s348
          %p345 = scmp.ge.s32.totalorder %s344, 1
          %s349 = sphi [#allocation1], [#allocation1]
          %s350 = sphi %s1, %s1
        $region50: #{custom-call.10} parent=46 // loop_header_branch
          %347 = sbr.rel (%p345) target = $region54
        $region51: #{custom-call.10} parent=46 // loop_body
          %v351 = vld [vmem:[%s349] sm:%s342]
          %352 = vst [vmem:[%s350] sm:%s342] %v351
          %v353 = vld [vmem:[%s349 + $0x8] sm:%s342]
          %354 = vst [vmem:[%s350 + $0x8] sm:%s342] %v353
        $region52: #{custom-call.10} parent=46 // loop_footer
          %s348 = sadd.s32 1, %s344
        $region53: #{custom-call.10} parent=46 // loop_footer_branch
          %343 = sbr.rel target = $region49
        $region54: #{custom-call.10} parent=46 // loop_exit
          _
      $region47: #{custom-call.10} parent=38 // pred_fallthru
        _
    $region39: #{custom-call.10} parent=1 // pred_fallthru
      _
    %371 = vnop

// kernel: custom-call.9
$region0: #{custom-call.9}
  %s0 = inlined_call_operand.vmem [shape: f32[1,16,16], index: 0, kind: input, shape index: {}]
  %s1 = inlined_call_operand.vmem [shape: f32[1,16,16], index: 1, kind: output, shape index: {}]
  $region1: #{custom-call.9} parent=0
    #allocation0 [shape = 'u8[8192]{0}', space=vmem, size = 0x2000, scoped, tag = 'operand span for operand 0']
    #allocation1 [shape = 'u8[8192]{0}', space=vmem, size = 0x2000, scoped, tag = 'operand span for operand 1']
    #allocation2 [shape = 'f32[16,16]{1,0}', space=vmem, size = 0x2000, scoped, tag = 'rescaled input a']
    // Predicated region
    $region2: #{custom-call.9} parent=1 // pred_check
      _
    $region3: #{custom-call.9} parent=1 // pred_check_branch
      %3 = sbr.rel (0) target = $region5
    $region4: #{custom-call.9} parent=1 // pred_region
      // Predicated region
      $region6: #{custom-call.9} parent=4 // pred_check
        _
      $region7: #{custom-call.9} parent=4 // pred_check_branch
        %5 = sbr.rel (0) target = $region9
      $region8: #{custom-call.9} parent=4 // pred_region
        // Predicated region
        $region21: #{custom-call.9} parent=8 // pred_check
          _
        $region22: #{custom-call.9} parent=8 // pred_check_branch
          %23 = sbr.rel (0) target = $region24
        $region23: #{custom-call.9} parent=8 // pred_region
          loop: start=0, step=1, limit=1
          $region25: #{custom-call.9} parent=23 // loop_pre_header
            _
          $region26: #{custom-call.9} parent=23 // loop_header
            %s25 = sphi 0, %s29
            %p26 = scmp.ge.s32.totalorder %s25, 1
            %s30 = sphi %s0, %s0
            %s31 = sphi [#allocation0], [#allocation0]
          $region27: #{custom-call.9} parent=23 // loop_header_branch
            %28 = sbr.rel (%p26) target = $region31
          $region28: #{custom-call.9} parent=23 // loop_body
            %v32 = vld [vmem:[%s30] sm:$0xff]
            %33 = vst [vmem:[%s31] sm:$0xff] %v32
            %v34 = vld [vmem:[%s30 + $0x8] sm:$0xff]
            %35 = vst [vmem:[%s31 + $0x8] sm:$0xff] %v34
          $region29: #{custom-call.9} parent=23 // loop_footer
            %s29 = sadd.s32 1, %s25
          $region30: #{custom-call.9} parent=23 // loop_footer_branch
            %24 = sbr.rel target = $region26
          $region31: #{custom-call.9} parent=23 // loop_exit
            _
        $region24: #{custom-call.9} parent=8 // pred_fallthru
          _
        // Predicated region
        $region32: #{custom-call.9} parent=8 // pred_check
          _
        $region33: #{custom-call.9} parent=8 // pred_check_branch
          %37 = sbr.rel target = $region35
        $region34: #{custom-call.9} parent=8 // pred_region
          _
        $region35: #{custom-call.9} parent=8 // pred_fallthru
          _
      $region9: #{custom-call.9} parent=4 // pred_fallthru
        _
      // Predicated region
      $region10: #{custom-call.9} parent=4 // pred_check
        _
      $region11: #{custom-call.9} parent=4 // pred_check_branch
        %7 = sbr.rel target = $region13
      $region12: #{custom-call.9} parent=4 // pred_region
        %s9 = ssub.s32 256, 1
        loop: start=0, step=1, limit=1
        $region14: #{custom-call.9} parent=12 // loop_pre_header
          _
        $region15: #{custom-call.9} parent=12 // loop_header
          %s11 = sphi 0, %s15
          %p12 = scmp.ge.s32.totalorder %s11, 1
          %s16 = sphi %s0, %s0
          %s17 = sphi [#allocation0], [#allocation0]
        $region16: #{custom-call.9} parent=12 // loop_header_branch
          %14 = sbr.rel (%p12) target = $region20
        $region17: #{custom-call.9} parent=12 // loop_body
          %v18 = vld [vmem:[%s16] sm:%s9]
          %19 = vst [vmem:[%s17] sm:%s9] %v18
          %v20 = vld [vmem:[%s16 + $0x8] sm:%s9]
          %21 = vst [vmem:[%s17 + $0x8] sm:%s9] %v20
        $region18: #{custom-call.9} parent=12 // loop_footer
          %s15 = sadd.s32 1, %s11
        $region19: #{custom-call.9} parent=12 // loop_footer_branch
          %10 = sbr.rel target = $region15
        $region20: #{custom-call.9} parent=12 // loop_exit
          _
      $region13: #{custom-call.9} parent=4 // pred_fallthru
        _
    $region5: #{custom-call.9} parent=1 // pred_fallthru
      _
    %38 = vnop
    %v39 = vlaneseq
    %v40 = vand.u32 %v39, 127
    %vm41 = vcmp.lt.s32.totalorder %v40, 16
    %v42 = vlaneseq
    %v43 = vshrl.u32 %v42, 7
    %vm45 = vcmp.eq.s32.totalorder %v43, %v40
    %v46 = vld [vmem:[#allocation0] sm:$0xff]
    %v47 = vsel %vm45, %v46, 0.0
    %48 = vadd.xlane.f32.xlu0 %v47
    %v49 = vpop.xlane.xlu0 %48
    %vm50 = vcmp.le.s32.totalorder %v43, %v40
    %vm51 = vmand %vm50, %vm41
    %v52 = vsel %vm51, %v46, 0.0
    %v53 = vrcp.pop %v49
    %v54 = vmul.f32 %v49, %v53
    %v55 = vsub.f32 1.0, %v54
    %v56 = vmul.f32 %v53, %v55
    %v57 = vadd.f32 %v53, %v56
    %vm58 = vweird.f32 %v49
    %vm59 = vweird.f32 %v53
    %vm60 = vmor %vm58, %vm59
    %v61 = vsel %vm60, %v53, %v57
    %v62 = vand.u32 2147483647, %v49
    %vm63 = vcmp.eq.f32.partialorder %v62, 8.507059e+37
    %v64 = vand.u32 %v49, 2147483648
    %v65 = vor.u32 1.1754944e-38, %v64
    %v66 = vsel %vm63, %v65, %v61
    %v67 = vmul.f32 %v52, %v66
    %68 = vst [vmem:[#allocation2] sm:$0xff] %v67
    %s69 = scalar_lea.vmem [#allocation0], 8
    %s70 = scalar_lea.vmem [#allocation2], 8
    %v71 = vlaneseq
    %v72 = vshrl.u32 %v71, 7
    %v73 = vadd.s32 %v72, 8
    %vm74 = vcmp.eq.s32.totalorder %v73, %v40
    %v75 = vld [vmem:[%s69] sm:$0xff]
    %v76 = vsel %vm74, %v75, 0.0
    %77 = vadd.xlane.f32.xlu0 %v76
    %v78 = vpop.xlane.xlu0 %77
    %vm79 = vcmp.le.s32.totalorder %v73, %v40
    %vm80 = vmand %vm79, %vm41
    %v81 = vsel %vm80, %v75, 0.0
    %v82 = vrcp.pop %v78
    %v83 = vmul.f32 %v78, %v82
    %v84 = vsub.f32 1.0, %v83
    %v85 = vmul.f32 %v82, %v84
    %v86 = vadd.f32 %v82, %v85
    %vm87 = vweird.f32 %v78
    %vm88 = vweird.f32 %v82
    %vm89 = vmor %vm87, %vm88
    %v90 = vsel %vm89, %v82, %v86
    %v91 = vand.u32 2147483647, %v78
    %vm92 = vcmp.eq.f32.partialorder %v91, 8.507059e+37
    %v93 = vand.u32 %v78, 2147483648
    %v94 = vor.u32 1.1754944e-38, %v93
    %v95 = vsel %vm92, %v94, %v90
    %v96 = vmul.f32 %v81, %v95
    %97 = vst [vmem:[%s70] sm:$0xff] %v96
    %v98 = vlaneseq
    %v99 = vand.u32 %v98, 127
    %v100 = vlaneseq
    %v101 = vshrl.u32 %v100, 7
    %vm103 = vcmp.eq.s32.totalorder %v99, %v101
    %v104 = vsel %vm103, -1.0, 0.0
    %v105 = vlaneseq
    %v106 = vand.u32 %v105, 127
    %v107 = vlaneseq
    %v108 = vshrl.u32 %v107, 7
    %v109 = vadd.s32 %v108, 8
    %vm110 = vcmp.eq.s32.totalorder %v106, %v109
    %v111 = vlaneseq
    %v112 = vand.u32 %v111, 127
    %vm113 = vcmp.eq.s32.totalorder %v112, 15
    %v114 = vsel %vm113, 1.0, -1.0
    %v115 = vsel %vm110, %v114, 0.0
    %s116 = scalar_lea.vmem [#allocation2], 14
    %v117 = vld [vmem:[%s116] ss:$0 sm:$0xff]
    %v118 = vxor.u32 %v117, 2147483648
    %v119 = vlaneseq
    %v120 = vand.u32 %v119, 127
    %vm121 = vcmp.eq.s32.totalorder %v120, 14
    %v122 = vmul.f32 %v118, %v115
    %123 = vadd.xlane.f32.xlu0 %v122
    %v124 = vpop.xlane.xlu0 %123
    %v125 = vsel %vm121, %v124, %v115
    %s126 = scalar_lea.vmem [#allocation2], 13
    %v127 = vld [vmem:[%s126] ss:$0 sm:$0xff]
    %v128 = vxor.u32 %v127, 2147483648
    %v129 = vlaneseq
    %v130 = vand.u32 %v129, 127
    %vm131 = vcmp.eq.s32.totalorder %v130, 13
    %v132 = vmul.f32 %v128, %v125
    %133 = vadd.xlane.f32.xlu0 %v132
    %v134 = vpop.xlane.xlu0 %133
    %v135 = vsel %vm131, %v134, %v125
    %s136 = scalar_lea.vmem [#allocation2], 12
    %v137 = vld [vmem:[%s136] ss:$0 sm:$0xff]
    %v138 = vxor.u32 %v137, 2147483648
    %v139 = vlaneseq
    %v140 = vand.u32 %v139, 127
    %vm141 = vcmp.eq.s32.totalorder %v140, 12
    %v142 = vmul.f32 %v138, %v135
    %143 = vadd.xlane.f32.xlu0 %v142
    %v144 = vpop.xlane.xlu0 %143
    %v145 = vsel %vm141, %v144, %v135
    %s146 = scalar_lea.vmem [#allocation2], 11
    %v147 = vld [vmem:[%s146] ss:$0 sm:$0xff]
    %v148 = vxor.u32 %v147, 2147483648
    %v149 = vlaneseq
    %v150 = vand.u32 %v149, 127
    %vm151 = vcmp.eq.s32.totalorder %v150, 11
    %v152 = vmul.f32 %v148, %v145
    %153 = vadd.xlane.f32.xlu0 %v152
    %v154 = vpop.xlane.xlu0 %153
    %v155 = vsel %vm151, %v154, %v145
    %s156 = scalar_lea.vmem [#allocation2], 10
    %v157 = vld [vmem:[%s156] ss:$0 sm:$0xff]
    %v158 = vxor.u32 %v157, 2147483648
    %v159 = vlaneseq
    %v160 = vand.u32 %v159, 127
    %vm161 = vcmp.eq.s32.totalorder %v160, 10
    %v162 = vmul.f32 %v158, %v155
    %163 = vadd.xlane.f32.xlu0 %v162
    %v164 = vpop.xlane.xlu0 %163
    %v165 = vsel %vm161, %v164, %v155
    %s166 = scalar_lea.vmem [#allocation2], 9
    %v167 = vld [vmem:[%s166] ss:$0 sm:$0xff]
    %v168 = vxor.u32 %v167, 2147483648
    %v169 = vlaneseq
    %v170 = vand.u32 %v169, 127
    %vm171 = vcmp.eq.s32.totalorder %v170, 9
    %v172 = vmul.f32 %v168, %v165
    %173 = vadd.xlane.f32.xlu0 %v172
    %v174 = vpop.xlane.xlu0 %173
    %v175 = vsel %vm171, %v174, %v165
    %s176 = scalar_lea.vmem [#allocation2], 8
    %v177 = vld [vmem:[%s176] ss:$0 sm:$0xff]
    %v178 = vxor.u32 %v177, 2147483648
    %v179 = vlaneseq
    %v180 = vand.u32 %v179, 127
    %vm181 = vcmp.eq.s32.totalorder %v180, 8
    %v182 = vmul.f32 %v178, %v175
    %183 = vadd.xlane.f32.xlu0 %v182
    %v184 = vpop.xlane.xlu0 %183
    %v185 = vsel %vm181, %v184, %v175
    %s186 = scalar_lea.vmem [#allocation2], 7
    %v187 = vld [vmem:[%s186] ss:$0 sm:$0xff]
    %v188 = vxor.u32 %v187, 2147483648
    %v189 = vlaneseq
    %v190 = vand.u32 %v189, 127
    %vm191 = vcmp.eq.s32.totalorder %v190, 7
    %v192 = vmul.f32 %v188, %v104
    %193 = vadd.xlane.f32.xlu0 %v192
    %v194 = vpop.xlane.xlu0 %193
    %v195 = vsel %vm191, %v194, %v104
    %v196 = vmul.f32 %v188, %v185
    %197 = vadd.xlane.f32.xlu0 %v196
    %v198 = vpop.xlane.xlu0 %197
    %v199 = vsel %vm191, %v198, %v185
    %s200 = scalar_lea.vmem [#allocation2], 6
    %v201 = vld [vmem:[%s200] ss:$0 sm:$0xff]
    %v202 = vxor.u32 %v201, 2147483648
    %v203 = vlaneseq
    %v204 = vand.u32 %v203, 127
    %vm205 = vcmp.eq.s32.totalorder %v204, 6
    %v206 = vmul.f32 %v202, %v195
    %207 = vadd.xlane.f32.xlu0 %v206
    %v208 = vpop.xlane.xlu0 %207
    %v209 = vsel %vm205, %v208, %v195
    %v210 = vmul.f32 %v202, %v199
    %211 = vadd.xlane.f32.xlu0 %v210
    %v212 = vpop.xlane.xlu0 %211
    %v213 = vsel %vm205, %v212, %v199
    %s214 = scalar_lea.vmem [#allocation2], 5
    %v215 = vld [vmem:[%s214] ss:$0 sm:$0xff]
    %v216 = vxor.u32 %v215, 2147483648
    %v217 = vlaneseq
    %v218 = vand.u32 %v217, 127
    %vm219 = vcmp.eq.s32.totalorder %v218, 5
    %v220 = vmul.f32 %v216, %v209
    %221 = vadd.xlane.f32.xlu0 %v220
    %v222 = vpop.xlane.xlu0 %221
    %v223 = vsel %vm219, %v222, %v209
    %v224 = vmul.f32 %v216, %v213
    %225 = vadd.xlane.f32.xlu0 %v224
    %v226 = vpop.xlane.xlu0 %225
    %v227 = vsel %vm219, %v226, %v213
    %s228 = scalar_lea.vmem [#allocation2], 4
    %v229 = vld [vmem:[%s228] ss:$0 sm:$0xff]
    %v230 = vxor.u32 %v229, 2147483648
    %v231 = vlaneseq
    %v232 = vand.u32 %v231, 127
    %vm233 = vcmp.eq.s32.totalorder %v232, 4
    %v234 = vmul.f32 %v230, %v223
    %235 = vadd.xlane.f32.xlu0 %v234
    %v236 = vpop.xlane.xlu0 %235
    %v237 = vsel %vm233, %v236, %v223
    %v238 = vmul.f32 %v230, %v227
    %239 = vadd.xlane.f32.xlu0 %v238
    %v240 = vpop.xlane.xlu0 %239
    %v241 = vsel %vm233, %v240, %v227
    %s242 = scalar_lea.vmem [#allocation2], 3
    %v243 = vld [vmem:[%s242] ss:$0 sm:$0xff]
    %v244 = vxor.u32 %v243, 2147483648
    %v245 = vlaneseq
    %v246 = vand.u32 %v245, 127
    %vm247 = vcmp.eq.s32.totalorder %v246, 3
    %v248 = vmul.f32 %v244, %v237
    %249 = vadd.xlane.f32.xlu0 %v248
    %v250 = vpop.xlane.xlu0 %249
    %v251 = vsel %vm247, %v250, %v237
    %v252 = vmul.f32 %v244, %v241
    %253 = vadd.xlane.f32.xlu0 %v252
    %v254 = vpop.xlane.xlu0 %253
    %v255 = vsel %vm247, %v254, %v241
    %s256 = scalar_lea.vmem [#allocation2], 2
    %v257 = vld [vmem:[%s256] ss:$0 sm:$0xff]
    %v258 = vxor.u32 %v257, 2147483648
    %v259 = vlaneseq
    %v260 = vand.u32 %v259, 127
    %vm261 = vcmp.eq.s32.totalorder %v260, 2
    %v262 = vmul.f32 %v258, %v251
    %263 = vadd.xlane.f32.xlu0 %v262
    %v264 = vpop.xlane.xlu0 %263
    %v265 = vsel %vm261, %v264, %v251
    %v266 = vmul.f32 %v258, %v255
    %267 = vadd.xlane.f32.xlu0 %v266
    %v268 = vpop.xlane.xlu0 %267
    %v269 = vsel %vm261, %v268, %v255
    %s270 = scalar_lea.vmem [#allocation2], 1
    %v271 = vld [vmem:[%s270] ss:$0 sm:$0xff]
    %v272 = vxor.u32 %v271, 2147483648
    %v273 = vlaneseq
    %v274 = vand.u32 %v273, 127
    %vm275 = vcmp.eq.s32.totalorder %v274, 1
    %v276 = vmul.f32 %v272, %v265
    %277 = vadd.xlane.f32.xlu0 %v276
    %v278 = vpop.xlane.xlu0 %277
    %v279 = vsel %vm275, %v278, %v265
    %v280 = vmul.f32 %v272, %v269
    %281 = vadd.xlane.f32.xlu0 %v280
    %v282 = vpop.xlane.xlu0 %281
    %v283 = vsel %vm275, %v282, %v269
    %v284 = vld [vmem:[#allocation2] ss:$0 sm:$0xff]
    %v285 = vxor.u32 %v284, 2147483648
    %v286 = vlaneseq
    %v287 = vand.u32 %v286, 127
    %vm288 = vcmp.eq.s32.totalorder %v287, 0
    %v289 = vmul.f32 %v285, %v279
    %290 = vadd.xlane.f32.xlu0 %v289
    %v291 = vpop.xlane.xlu0 %290
    %v292 = vsel %vm288, %v291, %v279
    %v293 = vmul.f32 %v285, %v283
    %294 = vadd.xlane.f32.xlu0 %v293
    %v295 = vpop.xlane.xlu0 %294
    %v296 = vsel %vm288, %v295, %v283
    %v297 = vrcp.pop %v49
    %v298 = vmul.f32 %v49, %v297
    %v299 = vsub.f32 1.0, %v298
    %v300 = vmul.f32 %v297, %v299
    %v301 = vadd.f32 %v297, %v300
    %vm302 = vweird.f32 %v49
    %vm303 = vweird.f32 %v297
    %vm304 = vmor %vm302, %vm303
    %v305 = vsel %vm304, %v297, %v301
    %v306 = vand.u32 2147483647, %v49
    %vm307 = vcmp.eq.f32.partialorder %v306, 8.507059e+37
    %v308 = vand.u32 %v49, 2147483648
    %v309 = vor.u32 1.1754944e-38, %v308
    %v310 = vsel %vm307, %v309, %v305
    %v311 = vmul.f32 %v292, %v310
    %vm312 = vweird.f32 %v49
    %v313 = vsel %vm312, %v292, %v311
    %314 = vst [vmem:[#allocation1] sm:$0xff] %v313
    %v315 = vrcp.pop %v78
    %v316 = vmul.f32 %v78, %v315
    %v317 = vsub.f32 1.0, %v316
    %v318 = vmul.f32 %v315, %v317
    %v319 = vadd.f32 %v315, %v318
    %vm320 = vweird.f32 %v78
    %vm321 = vweird.f32 %v315
    %vm322 = vmor %vm320, %vm321
    %v323 = vsel %vm322, %v315, %v319
    %v324 = vand.u32 2147483647, %v78
    %vm325 = vcmp.eq.f32.partialorder %v324, 8.507059e+37
    %v326 = vand.u32 %v78, 2147483648
    %v327 = vor.u32 1.1754944e-38, %v326
    %v328 = vsel %vm325, %v327, %v323
    %v329 = vmul.f32 %v296, %v328
    %vm330 = vweird.f32 %v78
    %v331 = vsel %vm330, %v296, %v329
    %s332 = scalar_lea.vmem [#allocation1], 8
    %333 = vst [vmem:[%s332] sm:$0xff] %v331
    // Predicated region
    $region36: #{custom-call.9} parent=1 // pred_check
      _
    $region37: #{custom-call.9} parent=1 // pred_check_branch
      %335 = sbr.rel (0) target = $region39
    $region38: #{custom-call.9} parent=1 // pred_region
      // Predicated region
      $region40: #{custom-call.9} parent=38 // pred_check
        _
      $region41: #{custom-call.9} parent=38 // pred_check_branch
        %337 = sbr.rel (0) target = $region43
      $region42: #{custom-call.9} parent=38 // pred_region
        // Predicated region
        $region55: #{custom-call.9} parent=42 // pred_check
          _
        $region56: #{custom-call.9} parent=42 // pred_check_branch
          %355 = sbr.rel (0) target = $region58
        $region57: #{custom-call.9} parent=42 // pred_region
          loop: start=0, step=1, limit=1
          $region59: #{custom-call.9} parent=57 // loop_pre_header
            _
          $region60: #{custom-call.9} parent=57 // loop_header
            %s357 = sphi 0, %s361
            %p358 = scmp.ge.s32.totalorder %s357, 1
            %s362 = sphi [#allocation1], [#allocation1]
            %s363 = sphi %s1, %s1
          $region61: #{custom-call.9} parent=57 // loop_header_branch
            %360 = sbr.rel (%p358) target = $region65
          $region62: #{custom-call.9} parent=57 // loop_body
            %v364 = vld [vmem:[%s362] sm:$0xff]
            %365 = vst [vmem:[%s363] sm:$0xff] %v364
            %v366 = vld [vmem:[%s362 + $0x8] sm:$0xff]
            %367 = vst [vmem:[%s363 + $0x8] sm:$0xff] %v366
          $region63: #{custom-call.9} parent=57 // loop_footer
            %s361 = sadd.s32 1, %s357
          $region64: #{custom-call.9} parent=57 // loop_footer_branch
            %356 = sbr.rel target = $region60
          $region65: #{custom-call.9} parent=57 // loop_exit
            _
        $region58: #{custom-call.9} parent=42 // pred_fallthru
          _
        // Predicated region
        $region66: #{custom-call.9} parent=42 // pred_check
          _
        $region67: #{custom-call.9} parent=42 // pred_check_branch
          %369 = sbr.rel target = $region69
        $region68: #{custom-call.9} parent=42 // pred_region
          _
        $region69: #{custom-call.9} parent=42 // pred_fallthru
          _
      $region43: #{custom-call.9} parent=38 // pred_fallthru
        _
      // Predicated region
      $region44: #{custom-call.9} parent=38 // pred_check
        _
      $region45: #{custom-call.9} parent=38 // pred_check_branch
        %339 = sbr.rel target = $region47
      $region46: #{custom-call.9} parent=38 // pred_region
        %s341 = ssub.s32 256, 1
        loop: start=0, step=1, limit=1
        $region48: #{custom-call.9} parent=46 // loop_pre_header
          _
        $region49: #{custom-call.9} parent=46 // loop_header
          %s343 = sphi 0, %s347
          %p344 = scmp.ge.s32.totalorder %s343, 1
          %s348 = sphi [#allocation1], [#allocation1]
          %s349 = sphi %s1, %s1
        $region50: #{custom-call.9} parent=46 // loop_header_branch
          %346 = sbr.rel (%p344) target = $region54
        $region51: #{custom-call.9} parent=46 // loop_body
          %v350 = vld [vmem:[%s348] sm:%s341]
          %351 = vst [vmem:[%s349] sm:%s341] %v350
          %v352 = vld [vmem:[%s348 + $0x8] sm:%s341]
          %353 = vst [vmem:[%s349 + $0x8] sm:%s341] %v352
        $region52: #{custom-call.9} parent=46 // loop_footer
          %s347 = sadd.s32 1, %s343
        $region53: #{custom-call.9} parent=46 // loop_footer_branch
          %342 = sbr.rel target = $region49
        $region54: #{custom-call.9} parent=46 // loop_exit
          _
      $region47: #{custom-call.9} parent=38 // pred_fallthru
        _
    $region39: #{custom-call.9} parent=1 // pred_fallthru
      _
    %370 = vnop

// kernel: gnnhf_conv.3
$region0: #{gnnhf_conv.3}
  #allocation0 [shape = 'u32[]', space=smem, size = 0x4, offset = 0x4, fixed_abs, tag = 'smem constant byte address 0x4 - core index']
  #allocation1 [shape = 'u32[72,128]{1,0:T(1,128)}', space=vmem, size = 0x9000, scoped, tag = 'internal scratch']
  #allocation2 [shape = 'f32[128,128]{1,0:T(8,128)}', space=vmem, size = 0x10000, scoped, tag = 'scratch operand']
  %s0 = inlined_call_operand.vmem [shape: f32[128,128], index: 0, kind: input, shape index: {}]
  %s1 = inlined_call_operand.vmem [shape: f32[128,1], index: 1, kind: input, shape index: {}]
  %s2 = inlined_call_operand.vmem [shape: f32[1,128], index: 2, kind: input, shape index: {}]
  %s3 = inlined_call_operand.vmem [shape: f32[128,128], index: 3, kind: input, shape index: {}]
  %s4 = inlined_call_operand.vmem [shape: f32[128,128], index: 4, kind: output, shape index: {0}]
  %s5 = inlined_call_operand.vmem [shape: f32[128,128], index: 5, kind: output, shape index: {1}]
  %6 = xla_tuple %s4, %s5
  %s7 = sld [smem:[#allocation0]]
  $region50: #{gnnhf_conv.3} parent=0
    _
  %s9 = ssub.s32 1, %s7
  %s10 = scalar_select 0, %s9, %s7
  // Predicated region
  $region2: #{gnnhf_conv.3} parent=0 // pred_check
    _
  $region3: #{gnnhf_conv.3} parent=0 // pred_check_branch
    %12 = sbr.rel (0) target = $region5
  $region4: #{gnnhf_conv.3} parent=0 // pred_region
    _
  $region5: #{gnnhf_conv.3} parent=0 // pred_fallthru
    _
  // Predicated region
  $region6: #{gnnhf_conv.3} parent=0 // pred_check
    _
  $region7: #{gnnhf_conv.3} parent=0 // pred_check_branch
    %14 = sbr.rel (0) target = $region9
  $region8: #{gnnhf_conv.3} parent=0 // pred_region
    _
  $region9: #{gnnhf_conv.3} parent=0 // pred_fallthru
    _
  // Predicated region
  $region10: #{gnnhf_conv.3} parent=0 // pred_check
    _
  $region11: #{gnnhf_conv.3} parent=0 // pred_check_branch
    %16 = sbr.rel (0) target = $region13
  $region12: #{gnnhf_conv.3} parent=0 // pred_region
    _
  $region13: #{gnnhf_conv.3} parent=0 // pred_fallthru
    _
  // Predicated region
  $region14: #{gnnhf_conv.3} parent=0 // pred_check
    _
  $region15: #{gnnhf_conv.3} parent=0 // pred_check_branch
    %18 = sbr.rel (0) target = $region17
  $region16: #{gnnhf_conv.3} parent=0 // pred_region
    _
  $region17: #{gnnhf_conv.3} parent=0 // pred_fallthru
    _
  %p19 = scmp.eq.s32.totalorder 0, 0
  // Predicated region
  $region18: #{gnnhf_conv.3} parent=0 // pred_check
    %p20 = pneg %p19
  $region19: #{gnnhf_conv.3} parent=0 // pred_check_branch
    %22 = sbr.rel (%p20) target = $region21
  $region20: #{gnnhf_conv.3} parent=0 // pred_region
    %23 = vst [vmem:[#allocation2] sm:$0xff] 0.0
    %24 = vst [vmem:[#allocation2 + $0x8] sm:$0xff] 0.0
    %25 = vst [vmem:[#allocation2 + $0x10] sm:$0xff] 0.0
    %26 = vst [vmem:[#allocation2 + $0x18] sm:$0xff] 0.0
    %27 = vst [vmem:[#allocation2 + $0x20] sm:$0xff] 0.0
    %28 = vst [vmem:[#allocation2 + $0x28] sm:$0xff] 0.0
    %29 = vst [vmem:[#allocation2 + $0x30] sm:$0xff] 0.0
    %30 = vst [vmem:[#allocation2 + $0x38] sm:$0xff] 0.0
    %31 = vst [vmem:[#allocation2 + $0x40] sm:$0xff] 0.0
    %32 = vst [vmem:[#allocation2 + $0x48] sm:$0xff] 0.0
    %33 = vst [vmem:[#allocation2 + $0x50] sm:$0xff] 0.0
    %34 = vst [vmem:[#allocation2 + $0x58] sm:$0xff] 0.0
    %35 = vst [vmem:[#allocation2 + $0x60] sm:$0xff] 0.0
    %36 = vst [vmem:[#allocation2 + $0x68] sm:$0xff] 0.0
    %37 = vst [vmem:[#allocation2 + $0x70] sm:$0xff] 0.0
    %38 = vst [vmem:[#allocation2 + $0x78] sm:$0xff] 0.0
  $region21: #{gnnhf_conv.3} parent=0 // pred_fallthru
    _
  %v39 = vld [vmem:[%s1] sm:$0xff]
  %v40 = vld [vmem:[%s1 + $0x8] sm:$0xff]
  %v41 = vld [vmem:[%s1 + $0x10] sm:$0xff]
  %v42 = vld [vmem:[%s1 + $0x18] sm:$0xff]
  %v43 = vld [vmem:[%s1 + $0x20] sm:$0xff]
  %v44 = vld [vmem:[%s1 + $0x28] sm:$0xff]
  %v45 = vld [vmem:[%s1 + $0x30] sm:$0xff]
  %v46 = vld [vmem:[%s1 + $0x38] sm:$0xff]
  %v47 = vld [vmem:[%s1 + $0x40] sm:$0xff]
  %v48 = vld [vmem:[%s1 + $0x48] sm:$0xff]
  %v49 = vld [vmem:[%s1 + $0x50] sm:$0xff]
  %v50 = vld [vmem:[%s1 + $0x58] sm:$0xff]
  %v51 = vld [vmem:[%s1 + $0x60] sm:$0xff]
  %v52 = vld [vmem:[%s1 + $0x68] sm:$0xff]
  %v53 = vld [vmem:[%s1 + $0x70] sm:$0xff]
  %v54 = vld [vmem:[%s1 + $0x78] sm:$0xff]
  %v55 = vld [vmem:[%s0] sm:$0xff]
  %v56 = vld [vmem:[%s0 + $0x8] sm:$0xff]
  %v57 = vld [vmem:[%s0 + $0x10] sm:$0xff]
  %v58 = vld [vmem:[%s0 + $0x18] sm:$0xff]
  %v59 = vld [vmem:[%s0 + $0x20] sm:$0xff]
  %v60 = vld [vmem:[%s0 + $0x28] sm:$0xff]
  %v61 = vld [vmem:[%s0 + $0x30] sm:$0xff]
  %v62 = vld [vmem:[%s0 + $0x38] sm:$0xff]
  %v63 = vld [vmem:[%s0 + $0x40] sm:$0xff]
  %v64 = vld [vmem:[%s0 + $0x48] sm:$0xff]
  %v65 = vld [vmem:[%s0 + $0x50] sm:$0xff]
  %v66 = vld [vmem:[%s0 + $0x58] sm:$0xff]
  %v67 = vld [vmem:[%s0 + $0x60] sm:$0xff]
  %v68 = vld [vmem:[%s0 + $0x68] sm:$0xff]
  %v69 = vld [vmem:[%s0 + $0x70] sm:$0xff]
  %v70 = vld [vmem:[%s0 + $0x78] sm:$0xff]
  %72 = vset.pattern.permute.xlu0 0
  %73 = vperm.xlu0 %72, %v39
  %v74 = vpop.permute.xlu0 %73
  %77 = vset.pattern.permute.xlu0 0
  %78 = vperm.xlu0 %77, %v40
  %v79 = vpop.permute.xlu0 %78
  %82 = vset.pattern.permute.xlu0 0
  %83 = vperm.xlu0 %82, %v41
  %v84 = vpop.permute.xlu0 %83
  %87 = vset.pattern.permute.xlu0 0
  %88 = vperm.xlu0 %87, %v42
  %v89 = vpop.permute.xlu0 %88
  %92 = vset.pattern.permute.xlu0 0
  %93 = vperm.xlu0 %92, %v43
  %v94 = vpop.permute.xlu0 %93
  %97 = vset.pattern.permute.xlu0 0
  %98 = vperm.xlu0 %97, %v44
  %v99 = vpop.permute.xlu0 %98
  %102 = vset.pattern.permute.xlu0 0
  %103 = vperm.xlu0 %102, %v45
  %v104 = vpop.permute.xlu0 %103
  %107 = vset.pattern.permute.xlu0 0
  %108 = vperm.xlu0 %107, %v46
  %v109 = vpop.permute.xlu0 %108
  %112 = vset.pattern.permute.xlu0 0
  %113 = vperm.xlu0 %112, %v47
  %v114 = vpop.permute.xlu0 %113
  %117 = vset.pattern.permute.xlu0 0
  %118 = vperm.xlu0 %117, %v48
  %v119 = vpop.permute.xlu0 %118
  %122 = vset.pattern.permute.xlu0 0
  %123 = vperm.xlu0 %122, %v49
  %v124 = vpop.permute.xlu0 %123
  %127 = vset.pattern.permute.xlu0 0
  %128 = vperm.xlu0 %127, %v50
  %v129 = vpop.permute.xlu0 %128
  %132 = vset.pattern.permute.xlu0 0
  %133 = vperm.xlu0 %132, %v51
  %v134 = vpop.permute.xlu0 %133
  %137 = vset.pattern.permute.xlu0 0
  %138 = vperm.xlu0 %137, %v52
  %v139 = vpop.permute.xlu0 %138
  %142 = vset.pattern.permute.xlu0 0
  %143 = vperm.xlu0 %142, %v53
  %v144 = vpop.permute.xlu0 %143
  %147 = vset.pattern.permute.xlu0 0
  %148 = vperm.xlu0 %147, %v54
  %v149 = vpop.permute.xlu0 %148
  %v151 = vmul.f32 %v74, %v55
  %v152 = vmul.f32 %v79, %v56
  %v153 = vmul.f32 %v84, %v57
  %v154 = vmul.f32 %v89, %v58
  %v155 = vmul.f32 %v94, %v59
  %v156 = vmul.f32 %v99, %v60
  %v157 = vmul.f32 %v104, %v61
  %v158 = vmul.f32 %v109, %v62
  %v159 = vmul.f32 %v114, %v63
  %v160 = vmul.f32 %v119, %v64
  %v161 = vmul.f32 %v124, %v65
  %v162 = vmul.f32 %v129, %v66
  %v163 = vmul.f32 %v134, %v67
  %v164 = vmul.f32 %v139, %v68
  %v165 = vmul.f32 %v144, %v69
  %v166 = vmul.f32 %v149, %v70
  %v167 = vld [vmem:[%s2] sm:$0x1]
  %v169 = vperm.slane %v167, 0
  %v171 = vmul.f32 %v151, %v169
  %v172 = vmul.f32 %v152, %v169
  %v173 = vmul.f32 %v153, %v169
  %v174 = vmul.f32 %v154, %v169
  %v175 = vmul.f32 %v155, %v169
  %v176 = vmul.f32 %v156, %v169
  %v177 = vmul.f32 %v157, %v169
  %v178 = vmul.f32 %v158, %v169
  %v179 = vmul.f32 %v159, %v169
  %v180 = vmul.f32 %v160, %v169
  %v181 = vmul.f32 %v161, %v169
  %v182 = vmul.f32 %v162, %v169
  %v183 = vmul.f32 %v163, %v169
  %v184 = vmul.f32 %v164, %v169
  %v185 = vmul.f32 %v165, %v169
  %v186 = vmul.f32 %v166, %v169
  %v187 = vmul.f32 %v171, -9.5
  %v188 = vmul.f32 %v172, -9.5
  %v189 = vmul.f32 %v173, -9.5
  %v190 = vmul.f32 %v174, -9.5
  %v191 = vmul.f32 %v175, -9.5
  %v192 = vmul.f32 %v176, -9.5
  %v193 = vmul.f32 %v177, -9.5
  %v194 = vmul.f32 %v178, -9.5
  %v195 = vmul.f32 %v179, -9.5
  %v196 = vmul.f32 %v180, -9.5
  %v197 = vmul.f32 %v181, -9.5
  %v198 = vmul.f32 %v182, -9.5
  %v199 = vmul.f32 %v183, -9.5
  %v200 = vmul.f32 %v184, -9.5
  %v201 = vmul.f32 %v185, -9.5
  %v202 = vmul.f32 %v186, -9.5
  %203 = vst [vmem:[%s4] sm:$0xff] %v187
  %204 = vst [vmem:[%s4 + $0x8] sm:$0xff] %v188
  %205 = vst [vmem:[%s4 + $0x10] sm:$0xff] %v189
  %206 = vst [vmem:[%s4 + $0x18] sm:$0xff] %v190
  %207 = vst [vmem:[%s4 + $0x20] sm:$0xff] %v191
  %208 = vst [vmem:[%s4 + $0x28] sm:$0xff] %v192
  %209 = vst [vmem:[%s4 + $0x30] sm:$0xff] %v193
  %210 = vst [vmem:[%s4 + $0x38] sm:$0xff] %v194
  %211 = vst [vmem:[%s4 + $0x40] sm:$0xff] %v195
  %212 = vst [vmem:[%s4 + $0x48] sm:$0xff] %v196
  %213 = vst [vmem:[%s4 + $0x50] sm:$0xff] %v197
  %214 = vst [vmem:[%s4 + $0x58] sm:$0xff] %v198
  %215 = vst [vmem:[%s4 + $0x60] sm:$0xff] %v199
  %216 = vst [vmem:[%s4 + $0x68] sm:$0xff] %v200
  %217 = vst [vmem:[%s4 + $0x70] sm:$0xff] %v201
  %218 = vst [vmem:[%s4 + $0x78] sm:$0xff] %v202
  %p219 = scmp.eq.s32.totalorder 0, 0
  // Predicated region
  $region22: #{gnnhf_conv.3} parent=0 // pred_check
    %p220 = pneg %p219
  $region23: #{gnnhf_conv.3} parent=0 // pred_check_branch
    %222 = sbr.rel (%p220) target = $region25
  $region24: #{gnnhf_conv.3} parent=0 // pred_region
    %v223 = vlaneseq
    %v224 = vshrl.u32 %v223, 7
    %v225 = vadd.s32 %v224, 8
    %v226 = vadd.s32 %v224, 16
    %v227 = vadd.s32 %v224, 24
    %v228 = vadd.s32 %v224, 32
    %v229 = vadd.s32 %v224, 40
    %v230 = vadd.s32 %v224, 48
    %v231 = vadd.s32 %v224, 56
    %v232 = vadd.s32 %v224, 64
    %v233 = vadd.s32 %v224, 72
    %v234 = vadd.s32 %v224, 80
    %v235 = vadd.s32 %v224, 88
    %v236 = vadd.s32 %v224, 96
    %v237 = vadd.s32 %v224, 104
    %v238 = vadd.s32 %v224, 112
    %v239 = vadd.s32 %v224, 120
    %v240 = vlaneseq
    %v241 = vand.u32 %v240, 127
    %v242 = vld [vmem:[%s4] sm:$0xff]
    %v243 = vld [vmem:[%s4 + $0x8] sm:$0xff]
    %v244 = vld [vmem:[%s4 + $0x10] sm:$0xff]
    %v245 = vld [vmem:[%s4 + $0x18] sm:$0xff]
    %v246 = vld [vmem:[%s4 + $0x20] sm:$0xff]
    %v247 = vld [vmem:[%s4 + $0x28] sm:$0xff]
    %v248 = vld [vmem:[%s4 + $0x30] sm:$0xff]
    %v249 = vld [vmem:[%s4 + $0x38] sm:$0xff]
    %v250 = vld [vmem:[%s4 + $0x40] sm:$0xff]
    %v251 = vld [vmem:[%s4 + $0x48] sm:$0xff]
    %v252 = vld [vmem:[%s4 + $0x50] sm:$0xff]
    %v253 = vld [vmem:[%s4 + $0x58] sm:$0xff]
    %v254 = vld [vmem:[%s4 + $0x60] sm:$0xff]
    %v255 = vld [vmem:[%s4 + $0x68] sm:$0xff]
    %v256 = vld [vmem:[%s4 + $0x70] sm:$0xff]
    %v257 = vld [vmem:[%s4 + $0x78] sm:$0xff]
    %vm258 = vcmp.eq.s32.totalorder %v224, %v241
    %vm259 = vcmp.eq.s32.totalorder %v225, %v241
    %vm260 = vcmp.eq.s32.totalorder %v226, %v241
    %vm261 = vcmp.eq.s32.totalorder %v227, %v241
    %vm262 = vcmp.eq.s32.totalorder %v228, %v241
    %vm263 = vcmp.eq.s32.totalorder %v229, %v241
    %vm264 = vcmp.eq.s32.totalorder %v230, %v241
    %vm265 = vcmp.eq.s32.totalorder %v231, %v241
    %vm266 = vcmp.eq.s32.totalorder %v232, %v241
    %vm267 = vcmp.eq.s32.totalorder %v233, %v241
    %vm268 = vcmp.eq.s32.totalorder %v234, %v241
    %vm269 = vcmp.eq.s32.totalorder %v235, %v241
    %vm270 = vcmp.eq.s32.totalorder %v236, %v241
    %vm271 = vcmp.eq.s32.totalorder %v237, %v241
    %vm272 = vcmp.eq.s32.totalorder %v238, %v241
    %vm273 = vcmp.eq.s32.totalorder %v239, %v241
    %v274 = vsel %vm258, 10.5, 0.0
    %v275 = vsel %vm259, 10.5, 0.0
    %v276 = vsel %vm260, 10.5, 0.0
    %v277 = vsel %vm261, 10.5, 0.0
    %v278 = vsel %vm262, 10.5, 0.0
    %v279 = vsel %vm263, 10.5, 0.0
    %v280 = vsel %vm264, 10.5, 0.0
    %v281 = vsel %vm265, 10.5, 0.0
    %v282 = vsel %vm266, 10.5, 0.0
    %v283 = vsel %vm267, 10.5, 0.0
    %v284 = vsel %vm268, 10.5, 0.0
    %v285 = vsel %vm269, 10.5, 0.0
    %v286 = vsel %vm270, 10.5, 0.0
    %v287 = vsel %vm271, 10.5, 0.0
    %v288 = vsel %vm272, 10.5, 0.0
    %v289 = vsel %vm273, 10.5, 0.0
    %v290 = vadd.f32 %v242, %v274
    %v291 = vadd.f32 %v243, %v275
    %v292 = vadd.f32 %v244, %v276
    %v293 = vadd.f32 %v245, %v277
    %v294 = vadd.f32 %v246, %v278
    %v295 = vadd.f32 %v247, %v279
    %v296 = vadd.f32 %v248, %v280
    %v297 = vadd.f32 %v249, %v281
    %v298 = vadd.f32 %v250, %v282
    %v299 = vadd.f32 %v251, %v283
    %v300 = vadd.f32 %v252, %v284
    %v301 = vadd.f32 %v253, %v285
    %v302 = vadd.f32 %v254, %v286
    %v303 = vadd.f32 %v255, %v287
    %v304 = vadd.f32 %v256, %v288
    %v305 = vadd.f32 %v257, %v289
    %306 = vst [vmem:[%s4] sm:$0xff] %v290
    %307 = vst [vmem:[%s4 + $0x8] sm:$0xff] %v291
    %308 = vst [vmem:[%s4 + $0x10] sm:$0xff] %v292
    %309 = vst [vmem:[%s4 + $0x18] sm:$0xff] %v293
    %310 = vst [vmem:[%s4 + $0x20] sm:$0xff] %v294
    %311 = vst [vmem:[%s4 + $0x28] sm:$0xff] %v295
    %312 = vst [vmem:[%s4 + $0x30] sm:$0xff] %v296
    %313 = vst [vmem:[%s4 + $0x38] sm:$0xff] %v297
    %314 = vst [vmem:[%s4 + $0x40] sm:$0xff] %v298
    %315 = vst [vmem:[%s4 + $0x48] sm:$0xff] %v299
    %316 = vst [vmem:[%s4 + $0x50] sm:$0xff] %v300
    %317 = vst [vmem:[%s4 + $0x58] sm:$0xff] %v301
    %318 = vst [vmem:[%s4 + $0x60] sm:$0xff] %v302
    %319 = vst [vmem:[%s4 + $0x68] sm:$0xff] %v303
    %320 = vst [vmem:[%s4 + $0x70] sm:$0xff] %v304
    %321 = vst [vmem:[%s4 + $0x78] sm:$0xff] %v305
  $region25: #{gnnhf_conv.3} parent=0 // pred_fallthru
    _
  %v322 = vld [vmem:[%s3] sm:$0xff]
  %v323 = vld [vmem:[%s3 + $0x8] sm:$0xff]
  %v324 = vld [vmem:[%s3 + $0x10] sm:$0xff]
  %v325 = vld [vmem:[%s3 + $0x18] sm:$0xff]
  %v326 = vld [vmem:[%s3 + $0x20] sm:$0xff]
  %v327 = vld [vmem:[%s3 + $0x28] sm:$0xff]
  %v328 = vld [vmem:[%s3 + $0x30] sm:$0xff]
  %v329 = vld [vmem:[%s3 + $0x38] sm:$0xff]
  %v330 = vld [vmem:[%s3 + $0x40] sm:$0xff]
  %v331 = vld [vmem:[%s3 + $0x48] sm:$0xff]
  %v332 = vld [vmem:[%s3 + $0x50] sm:$0xff]
  %v333 = vld [vmem:[%s3 + $0x58] sm:$0xff]
  %v334 = vld [vmem:[%s3 + $0x60] sm:$0xff]
  %v335 = vld [vmem:[%s3 + $0x68] sm:$0xff]
  %v336 = vld [vmem:[%s3 + $0x70] sm:$0xff]
  %v337 = vld [vmem:[%s3 + $0x78] sm:$0xff]
  %v338 = vld [vmem:[#allocation2] sm:$0xff]
  %v339 = vld [vmem:[#allocation2 + $0x8] sm:$0xff]
  %v340 = vld [vmem:[#allocation2 + $0x10] sm:$0xff]
  %v341 = vld [vmem:[#allocation2 + $0x18] sm:$0xff]
  %v342 = vld [vmem:[#allocation2 + $0x20] sm:$0xff]
  %v343 = vld [vmem:[#allocation2 + $0x28] sm:$0xff]
  %v344 = vld [vmem:[#allocation2 + $0x30] sm:$0xff]
  %v345 = vld [vmem:[#allocation2 + $0x38] sm:$0xff]
  %v346 = vld [vmem:[#allocation2 + $0x40] sm:$0xff]
  %v347 = vld [vmem:[#allocation2 + $0x48] sm:$0xff]
  %v348 = vld [vmem:[#allocation2 + $0x50] sm:$0xff]
  %v349 = vld [vmem:[#allocation2 + $0x58] sm:$0xff]
  %v350 = vld [vmem:[#allocation2 + $0x60] sm:$0xff]
  %v351 = vld [vmem:[#allocation2 + $0x68] sm:$0xff]
  %v352 = vld [vmem:[#allocation2 + $0x70] sm:$0xff]
  %v353 = vld [vmem:[#allocation2 + $0x78] sm:$0xff]
  %354 = vmatpush.msra.mxu0 %v337
  %355 = vmatpush.msra.mxu0 %v336
  %356 = vmatpush.msra.mxu0 %v335
  %357 = vmatpush.msra.mxu0 %v334
  %358 = vmatpush.msra.mxu0 %v333
  %359 = vmatpush.msra.mxu0 %v332
  %360 = vmatpush.msra.mxu0 %v331
  %361 = vmatpush.msra.mxu0 %v330
  %362 = vmatpush.msra.mxu0 %v329
  %363 = vmatpush.msra.mxu0 %v328
  %364 = vmatpush.msra.mxu0 %v327
  %365 = vmatpush.msra.mxu0 %v326
  %366 = vmatpush.msra.mxu0 %v325
  %367 = vmatpush.msra.mxu0 %v324
  %368 = vmatpush.msra.mxu0 %v323
  %369 = vmatpush.msra.mxu0 %v322
  %370 = vmatmul.f32.gmra.mxu0 %v171
  %v371 = vpop.f32.mrf.mxu0
  %v372 = vadd.f32 0.0, %v371
  %373 = vmatmul.f32.gmra.mxu0 %v172
  %v374 = vpop.f32.mrf.mxu0
  %v375 = vadd.f32 0.0, %v374
  %376 = vmatmul.f32.gmra.mxu0 %v173
  %v377 = vpop.f32.mrf.mxu0
  %v378 = vadd.f32 0.0, %v377
  %379 = vmatmul.f32.gmra.mxu0 %v174
  %v380 = vpop.f32.mrf.mxu0
  %v381 = vadd.f32 0.0, %v380
  %382 = vmatmul.f32.gmra.mxu0 %v175
  %v383 = vpop.f32.mrf.mxu0
  %v384 = vadd.f32 0.0, %v383
  %385 = vmatmul.f32.gmra.mxu0 %v176
  %v386 = vpop.f32.mrf.mxu0
  %v387 = vadd.f32 0.0, %v386
  %388 = vmatmul.f32.gmra.mxu0 %v177
  %v389 = vpop.f32.mrf.mxu0
  %v390 = vadd.f32 0.0, %v389
  %391 = vmatmul.f32.gmra.mxu0 %v178
  %v392 = vpop.f32.mrf.mxu0
  %v393 = vadd.f32 0.0, %v392
  %394 = vmatmul.f32.gmra.mxu0 %v179
  %v395 = vpop.f32.mrf.mxu0
  %v396 = vadd.f32 0.0, %v395
  %397 = vmatmul.f32.gmra.mxu0 %v180
  %v398 = vpop.f32.mrf.mxu0
  %v399 = vadd.f32 0.0, %v398
  %400 = vmatmul.f32.gmra.mxu0 %v181
  %v401 = vpop.f32.mrf.mxu0
  %v402 = vadd.f32 0.0, %v401
  %403 = vmatmul.f32.gmra.mxu0 %v182
  %v404 = vpop.f32.mrf.mxu0
  %v405 = vadd.f32 0.0, %v404
  %406 = vmatmul.f32.gmra.mxu0 %v183
  %v407 = vpop.f32.mrf.mxu0
  %v408 = vadd.f32 0.0, %v407
  %409 = vmatmul.f32.gmra.mxu0 %v184
  %v410 = vpop.f32.mrf.mxu0
  %v411 = vadd.f32 0.0, %v410
  %412 = vmatmul.f32.gmra.mxu0 %v185
  %v413 = vpop.f32.mrf.mxu0
  %v414 = vadd.f32 0.0, %v413
  %415 = vmatmul.f32.gmra.mxu0 %v186
  %v416 = vpop.f32.mrf.mxu0
  %v417 = vadd.f32 0.0, %v416
  %418 = vdwg.mxu0
  %v419 = vmul.f32 %v372, 0.5
  %v420 = vmul.f32 %v375, 0.5
  %v421 = vmul.f32 %v378, 0.5
  %v422 = vmul.f32 %v381, 0.5
  %v423 = vmul.f32 %v384, 0.5
  %v424 = vmul.f32 %v387, 0.5
  %v425 = vmul.f32 %v390, 0.5
  %v426 = vmul.f32 %v393, 0.5
  %v427 = vmul.f32 %v396, 0.5
  %v428 = vmul.f32 %v399, 0.5
  %v429 = vmul.f32 %v402, 0.5
  %v430 = vmul.f32 %v405, 0.5
  %v431 = vmul.f32 %v408, 0.5
  %v432 = vmul.f32 %v411, 0.5
  %v433 = vmul.f32 %v414, 0.5
  %v434 = vmul.f32 %v417, 0.5
  %v435 = vadd.f32 %v338, %v419
  %v436 = vadd.f32 %v339, %v420
  %v437 = vadd.f32 %v340, %v421
  %v438 = vadd.f32 %v341, %v422
  %v439 = vadd.f32 %v342, %v423
  %v440 = vadd.f32 %v343, %v424
  %v441 = vadd.f32 %v344, %v425
  %v442 = vadd.f32 %v345, %v426
  %v443 = vadd.f32 %v346, %v427
  %v444 = vadd.f32 %v347, %v428
  %v445 = vadd.f32 %v348, %v429
  %v446 = vadd.f32 %v349, %v430
  %v447 = vadd.f32 %v350, %v431
  %v448 = vadd.f32 %v351, %v432
  %v449 = vadd.f32 %v352, %v433
  %v450 = vadd.f32 %v353, %v434
  %451 = vst [vmem:[#allocation2] sm:$0xff] %v435
  %452 = vst [vmem:[#allocation2 + $0x8] sm:$0xff] %v436
  %453 = vst [vmem:[#allocation2 + $0x10] sm:$0xff] %v437
  %454 = vst [vmem:[#allocation2 + $0x18] sm:$0xff] %v438
  %455 = vst [vmem:[#allocation2 + $0x20] sm:$0xff] %v439
  %456 = vst [vmem:[#allocation2 + $0x28] sm:$0xff] %v440
  %457 = vst [vmem:[#allocation2 + $0x30] sm:$0xff] %v441
  %458 = vst [vmem:[#allocation2 + $0x38] sm:$0xff] %v442
  %459 = vst [vmem:[#allocation2 + $0x40] sm:$0xff] %v443
  %460 = vst [vmem:[#allocation2 + $0x48] sm:$0xff] %v444
  %461 = vst [vmem:[#allocation2 + $0x50] sm:$0xff] %v445
  %462 = vst [vmem:[#allocation2 + $0x58] sm:$0xff] %v446
  %463 = vst [vmem:[#allocation2 + $0x60] sm:$0xff] %v447
  %464 = vst [vmem:[#allocation2 + $0x68] sm:$0xff] %v448
  %465 = vst [vmem:[#allocation2 + $0x70] sm:$0xff] %v449
  %466 = vst [vmem:[#allocation2 + $0x78] sm:$0xff] %v450
  %p467 = scmp.eq.s32.totalorder 0, 0
  // Predicated region
  $region26: #{gnnhf_conv.3} parent=0 // pred_check
    %p468 = pneg %p467
  $region27: #{gnnhf_conv.3} parent=0 // pred_check_branch
    %470 = sbr.rel (%p468) target = $region29
  $region28: #{gnnhf_conv.3} parent=0 // pred_region
    %v471 = vld [vmem:[#allocation2] sm:$0xff]
    %v472 = vld [vmem:[#allocation2 + $0x8] sm:$0xff]
    %v473 = vld [vmem:[#allocation2 + $0x10] sm:$0xff]
    %v474 = vld [vmem:[#allocation2 + $0x18] sm:$0xff]
    %v475 = vld [vmem:[#allocation2 + $0x20] sm:$0xff]
    %v476 = vld [vmem:[#allocation2 + $0x28] sm:$0xff]
    %v477 = vld [vmem:[#allocation2 + $0x30] sm:$0xff]
    %v478 = vld [vmem:[#allocation2 + $0x38] sm:$0xff]
    %v479 = vld [vmem:[#allocation2 + $0x40] sm:$0xff]
    %v480 = vld [vmem:[#allocation2 + $0x48] sm:$0xff]
    %v481 = vld [vmem:[#allocation2 + $0x50] sm:$0xff]
    %v482 = vld [vmem:[#allocation2 + $0x58] sm:$0xff]
    %v483 = vld [vmem:[#allocation2 + $0x60] sm:$0xff]
    %v484 = vld [vmem:[#allocation2 + $0x68] sm:$0xff]
    %v485 = vld [vmem:[#allocation2 + $0x70] sm:$0xff]
    %v486 = vld [vmem:[#allocation2 + $0x78] sm:$0xff]
    %v487 = vadd.f32 %v471, %v322
    %v488 = vadd.f32 %v472, %v323
    %v489 = vadd.f32 %v473, %v324
    %v490 = vadd.f32 %v474, %v325
    %v491 = vadd.f32 %v475, %v326
    %v492 = vadd.f32 %v476, %v327
    %v493 = vadd.f32 %v477, %v328
    %v494 = vadd.f32 %v478, %v329
    %v495 = vadd.f32 %v479, %v330
    %v496 = vadd.f32 %v480, %v331
    %v497 = vadd.f32 %v481, %v332
    %v498 = vadd.f32 %v482, %v333
    %v499 = vadd.f32 %v483, %v334
    %v500 = vadd.f32 %v484, %v335
    %v501 = vadd.f32 %v485, %v336
    %v502 = vadd.f32 %v486, %v337
    %503 = vst [vmem:[#allocation2] sm:$0xff] %v487
    %504 = vst [vmem:[#allocation2 + $0x8] sm:$0xff] %v488
    %505 = vst [vmem:[#allocation2 + $0x10] sm:$0xff] %v489
    %506 = vst [vmem:[#allocation2 + $0x18] sm:$0xff] %v490
    %507 = vst [vmem:[#allocation2 + $0x20] sm:$0xff] %v491
    %508 = vst [vmem:[#allocation2 + $0x28] sm:$0xff] %v492
    %509 = vst [vmem:[#allocation2 + $0x30] sm:$0xff] %v493
    %510 = vst [vmem:[#allocation2 + $0x38] sm:$0xff] %v494
    %511 = vst [vmem:[#allocation2 + $0x40] sm:$0xff] %v495
    %512 = vst [vmem:[#allocation2 + $0x48] sm:$0xff] %v496
    %513 = vst [vmem:[#allocation2 + $0x50] sm:$0xff] %v497
    %514 = vst [vmem:[#allocation2 + $0x58] sm:$0xff] %v498
    %515 = vst [vmem:[#allocation2 + $0x60] sm:$0xff] %v499
    %516 = vst [vmem:[#allocation2 + $0x68] sm:$0xff] %v500
    %517 = vst [vmem:[#allocation2 + $0x70] sm:$0xff] %v501
    %518 = vst [vmem:[#allocation2 + $0x78] sm:$0xff] %v502
  $region29: #{gnnhf_conv.3} parent=0 // pred_fallthru
    _
  // Predicated region
  $region30: #{gnnhf_conv.3} parent=0 // pred_check
    %p519 = pneg %p19
  $region31: #{gnnhf_conv.3} parent=0 // pred_check_branch
    %521 = sbr.rel (%p519) target = $region33
  $region32: #{gnnhf_conv.3} parent=0 // pred_region
    %v522 = vld [vmem:[#allocation2] sm:$0xff]
    %v523 = vld [vmem:[#allocation2 + $0x8] sm:$0xff]
    %v524 = vld [vmem:[#allocation2 + $0x10] sm:$0xff]
    %v525 = vld [vmem:[#allocation2 + $0x18] sm:$0xff]
    %v526 = vld [vmem:[#allocation2 + $0x20] sm:$0xff]
    %v527 = vld [vmem:[#allocation2 + $0x28] sm:$0xff]
    %v528 = vld [vmem:[#allocation2 + $0x30] sm:$0xff]
    %v529 = vld [vmem:[#allocation2 + $0x38] sm:$0xff]
    %v530 = vld [vmem:[#allocation2 + $0x40] sm:$0xff]
    %v531 = vld [vmem:[#allocation2 + $0x48] sm:$0xff]
    %v532 = vld [vmem:[#allocation2 + $0x50] sm:$0xff]
    %v533 = vld [vmem:[#allocation2 + $0x58] sm:$0xff]
    %v534 = vld [vmem:[#allocation2 + $0x60] sm:$0xff]
    %v535 = vld [vmem:[#allocation2 + $0x68] sm:$0xff]
    %v536 = vld [vmem:[#allocation2 + $0x70] sm:$0xff]
    %v537 = vld [vmem:[#allocation2 + $0x78] sm:$0xff]
    %538 = vst [vmem:[%s5] sm:$0xff] %v522
    %539 = vst [vmem:[%s5 + $0x8] sm:$0xff] %v523
    %540 = vst [vmem:[%s5 + $0x10] sm:$0xff] %v524
    %541 = vst [vmem:[%s5 + $0x18] sm:$0xff] %v525
    %542 = vst [vmem:[%s5 + $0x20] sm:$0xff] %v526
    %543 = vst [vmem:[%s5 + $0x28] sm:$0xff] %v527
    %544 = vst [vmem:[%s5 + $0x30] sm:$0xff] %v528
    %545 = vst [vmem:[%s5 + $0x38] sm:$0xff] %v529
    %546 = vst [vmem:[%s5 + $0x40] sm:$0xff] %v530
    %547 = vst [vmem:[%s5 + $0x48] sm:$0xff] %v531
    %548 = vst [vmem:[%s5 + $0x50] sm:$0xff] %v532
    %549 = vst [vmem:[%s5 + $0x58] sm:$0xff] %v533
    %550 = vst [vmem:[%s5 + $0x60] sm:$0xff] %v534
    %551 = vst [vmem:[%s5 + $0x68] sm:$0xff] %v535
    %552 = vst [vmem:[%s5 + $0x70] sm:$0xff] %v536
    %553 = vst [vmem:[%s5 + $0x78] sm:$0xff] %v537
  $region33: #{gnnhf_conv.3} parent=0 // pred_fallthru
    _
  // Predicated region
  $region34: #{gnnhf_conv.3} parent=0 // pred_check
    _
  $region35: #{gnnhf_conv.3} parent=0 // pred_check_branch
    %555 = sbr.rel (0) target = $region37
  $region36: #{gnnhf_conv.3} parent=0 // pred_region
    _
  $region37: #{gnnhf_conv.3} parent=0 // pred_fallthru
    _
  // Predicated region
  $region38: #{gnnhf_conv.3} parent=0 // pred_check
    _
  $region39: #{gnnhf_conv.3} parent=0 // pred_check_branch
    %557 = sbr.rel (0) target = $region41
  $region40: #{gnnhf_conv.3} parent=0 // pred_region
    _
  $region41: #{gnnhf_conv.3} parent=0 // pred_fallthru
    _
  // Predicated region
  $region42: #{gnnhf_conv.3} parent=0 // pred_check
    _
  $region43: #{gnnhf_conv.3} parent=0 // pred_check_branch
    %559 = sbr.rel (0) target = $region45
  $region44: #{gnnhf_conv.3} parent=0 // pred_region
    _
  $region45: #{gnnhf_conv.3} parent=0 // pred_fallthru
    _
  // Predicated region
  $region46: #{gnnhf_conv.3} parent=0 // pred_check
    _
  $region47: #{gnnhf_conv.3} parent=0 // pred_check_branch
    %561 = sbr.rel (0) target = $region49
  $region48: #{gnnhf_conv.3} parent=0 // pred_region
    _
  $region49: #{gnnhf_conv.3} parent=0 // pred_fallthru
    _

</llo_original>
